<compile_context>
chip_gen: v7x
topology: tpu7x:2x2x1
jax: 0.10.0
libtpu: 0.0.40
codegen_flags: <defaults>
</compile_context>

<pallas_src>
import functools

import jax
import jax.numpy as jnp
from jax import lax
from jax.experimental import pallas as pl
from jax.experimental.pallas import tpu as pltpu


def _round_up(x, m):
    return ((x + m - 1) // m) * m


def _mha_kernel(xq_ref, xkv_ref,
                wq_ref, bq_ref,
                wk_ref, bk_ref,
                wv_ref, bv_ref,
                wo_ref, bo_ref,
                o_ref,
                qh_s, k_s, v_s, m_s, l_s, acc_s,
                *, num_heads, l_tile, l_valid, matmul_dtype):
    mm = matmul_dtype
    qi = pl.program_id(1)
    li = pl.program_id(2)
    n_l = pl.num_programs(2)

    tq = qh_s.shape[1]
    c_pad = qh_s.shape[2]
    cv_pad = acc_s.shape[2]

    # ---- K/V projection + head relayout: once per (batch, kv-tile), reused across q-tiles.
    @pl.when(qi == 0)
    def _():
        xkv = xkv_ref[0].astype(mm)                                            # (l_tile, Dkv)
        k = jnp.dot(xkv, wk_ref[...], preferred_element_type=jnp.float32) + bk_ref[...]
        v = jnp.dot(xkv, wv_ref[...], preferred_element_type=jnp.float32) + bv_ref[...]
        k_s[li] = jnp.transpose(k.astype(mm).reshape(l_tile, num_heads, c_pad), (1, 0, 2))
        v_s[li] = jnp.transpose(v.astype(mm).reshape(l_tile, num_heads, cv_pad), (1, 0, 2))

    # ---- Q projection + online-softmax state init: once per (batch, q-tile).
    @pl.when(li == 0)
    def _():
        xq = xq_ref[0].astype(mm)                                              # (tq, Dq)
        # dp_scale is pre-folded into wq/bq in the wrapper.
        q = jnp.dot(xq, wq_ref[...], preferred_element_type=jnp.float32) + bq_ref[...]
        qh_s[...] = jnp.transpose(q.astype(mm).reshape(tq, num_heads, c_pad), (1, 0, 2))
        m_s[...] = jnp.full(m_s.shape, -jnp.inf, m_s.dtype)
        l_s[...] = jnp.zeros(l_s.shape, l_s.dtype)
        acc_s[...] = jnp.zeros(acc_s.shape, acc_s.dtype)

    qh = qh_s[...]     # (H, TQ, c_pad)     bf16
    kh = k_s[li]       # (H, l_tile, c_pad) bf16
    vh = v_s[li]       # (H, l_tile, cv_pad) bf16

    # Head-batched scores; contraction over the (lane-dense, zero-padded) head dim.
    s = jnp.einsum('hnc,hlc->hnl', qh, kh,
                   preferred_element_type=jnp.float32)                         # (H, TQ, l_tile) f32

    if l_valid is not None:
        # Ragged L: mask key positions that are zero-padding in the wrapper.
        col = li * l_tile + lax.broadcasted_iota(jnp.int32, s.shape, 2)
        s = jnp.where(col < l_valid, s, -1e30)

    # Online softmax update (all f32 on VPU/EUP).
    m_prev = m_s[...]
    m_new = jnp.maximum(m_prev, jnp.max(s, axis=-1, keepdims=True))
    alpha = jnp.exp(m_prev - m_new)
    p = jnp.exp(s - m_new)
    l_s[...] = alpha * l_s[...] + jnp.sum(p, axis=-1, keepdims=True)
    acc_s[...] = alpha * acc_s[...] + jnp.einsum('hnl,hlc->hnc', p.astype(mm), vh,
                                                 preferred_element_type=jnp.float32)
    m_s[...] = m_new

    # ---- Finalize: normalize and fold the heads straight into the output projection.
    @pl.when(li == n_l - 1)
    def _():
        oh = acc_s[...] * pl.reciprocal(l_s[...], approx=True)                 # (H, TQ, cv_pad) f32
        acc_o = jnp.zeros((tq, o_ref.shape[-1]), jnp.float32)
        for h in range(num_heads):  # static unroll: per-head MXU contraction, no (H,TQ,cv) transpose
            acc_o = acc_o + jnp.dot(oh[h].astype(mm), wo_ref[h],
                                    preferred_element_type=jnp.float32)
        o_ref[0] = (acc_o + bo_ref[...]).astype(o_ref.dtype)


def multi_head_attention(x_q, x_kv, params, *, num_heads,
                         matmul_dtype=jnp.bfloat16, q_tile=None, l_tile=None,
                         vmem_limit_bytes=None):
    """Pallas wrapper. x_q: (B, N, Dq), x_kv: (B, L, Dkv) -> (B, N, Co)."""
    B, N, Dq = x_q.shape
    _, L, Dkv = x_kv.shape
    wq, bq, wk, bk, wv, bv, wo, bo = params
    Cqk, Cv, Co = wq.shape[1], wv.shape[1], wo.shape[1]
    if Cqk % num_heads != 0 or Cv % num_heads != 0:
        raise ValueError("num_qk_channels / num_v_channels must be divisible by num_heads")
    c = Cqk // num_heads
    cv = Cv // num_heads
    dp_scale = float(c ** -0.5)

    # Lane-dense head / output dims (zero padding; exactness preserved, see kernel comments).
    c_pad = _round_up(c, 128)
    cv_pad = _round_up(cv, 128)
    co_pad = _round_up(Co, 128)

    # Tile sizes: 128/256-aligned q tiles (capped for v7x VMEM); pad ragged N / L instead of
    # falling back to one giant block.
    if q_tile is None:
        q_tile = 256 if N >= 256 else (128 if N >= 128 else _round_up(N, 8))
    q_tile = max(8, _round_up(q_tile, 8))
    n_pad = _round_up(N, q_tile)
    if l_tile is None:
        l_tile = 512 if L >= 512 else (128 if L >= 128 else _round_up(L, 8))
    l_tile = max(8, _round_up(l_tile, 8))
    l_pad = _round_up(L, l_tile)
    num_q_tiles = n_pad // q_tile
    num_l_tiles = l_pad // l_tile
    l_valid = None if l_pad == L else L

    xq_p = jnp.pad(x_q, ((0, 0), (0, n_pad - N), (0, 0))) if n_pad != N else x_q
    xkv_p = jnp.pad(x_kv, ((0, 0), (0, l_pad - L), (0, 0))) if l_pad != L else x_kv

    # ---- Weight prep (once, outside the kernel): fold dp_scale into Wq/bq, zero-pad each
    #      head's channel block to the lane-dense width, cast MXU operands to matmul_dtype,
    #      keep biases f32 (added to f32 accumulators).
    def pad_head_cols(w, b, cc, cc_p):
        w = w.astype(jnp.float32)
        b = b.astype(jnp.float32)
        if cc_p != cc:
            d = w.shape[0]
            w = jnp.pad(w.reshape(d, num_heads, cc),
                        ((0, 0), (0, 0), (0, cc_p - cc))).reshape(d, num_heads * cc_p)
            b = jnp.pad(b.reshape(num_heads, cc),
                        ((0, 0), (0, cc_p - cc))).reshape(num_heads * cc_p)
        return w, b.reshape(1, -1)

    wq_p, bq_p = pad_head_cols(wq * dp_scale, bq * dp_scale, c, c_pad)
    wk_p, bk_p = pad_head_cols(wk, bk, c, c_pad)
    wv_p, bv_p = pad_head_cols(wv, bv, cv, cv_pad)
    wq_p, wk_p, wv_p = (w.astype(matmul_dtype) for w in (wq_p, wk_p, wv_p))

    wo_h = wo.astype(jnp.float32).reshape(num_heads, cv, Co)
    wo_h = jnp.pad(wo_h, ((0, 0), (0, cv_pad - cv), (0, co_pad - Co))).astype(matmul_dtype)
    bo_p = jnp.pad(bo.astype(jnp.float32), (0, co_pad - Co)).reshape(1, co_pad)

    if vmem_limit_bytes is None:
        try:
            cap = pltpu.get_tpu_info().vmem_capacity_bytes
        except Exception:
            cap = 64 * 1024 * 1024
        # ~75% of physical VMEM, capped at 96 MiB (=> ~48 MiB on v7x, 96 MiB on v5e/v6e).
        vmem_limit_bytes = min(int(cap) * 3 // 4, 96 * 1024 * 1024)

    kernel = functools.partial(_mha_kernel, num_heads=num_heads, l_tile=l_tile,
                               l_valid=l_valid, matmul_dtype=matmul_dtype)

    full = lambda shape: pl.BlockSpec(shape, lambda b, qi, li: (0,) * len(shape))

    out = pl.pallas_call(
        kernel,
        out_shape=jax.ShapeDtypeStruct((B, n_pad, co_pad), x_q.dtype),
        grid_spec=pltpu.PrefetchScalarGridSpec(
            num_scalar_prefetch=0,
            grid=(B, num_q_tiles, num_l_tiles),
            in_specs=[
                pl.BlockSpec((1, q_tile, Dq), lambda b, qi, li: (b, qi, 0)),
                pl.BlockSpec((1, l_tile, Dkv), lambda b, qi, li: (b, li, 0)),
                full((Dq, num_heads * c_pad)), full((1, num_heads * c_pad)),
                full((Dkv, num_heads * c_pad)), full((1, num_heads * c_pad)),
                full((Dkv, num_heads * cv_pad)), full((1, num_heads * cv_pad)),
                full((num_heads, cv_pad, co_pad)), full((1, co_pad)),
            ],
            out_specs=pl.BlockSpec((1, q_tile, co_pad), lambda b, qi, li: (b, qi, 0)),
            scratch_shapes=[
                pltpu.VMEM((num_heads, q_tile, c_pad), matmul_dtype),              # qh cache
                pltpu.VMEM((num_l_tiles, num_heads, l_tile, c_pad), matmul_dtype),  # K cache
                pltpu.VMEM((num_l_tiles, num_heads, l_tile, cv_pad), matmul_dtype), # V cache
                pltpu.VMEM((num_heads, q_tile, 1), jnp.float32),                    # m
                pltpu.VMEM((num_heads, q_tile, 1), jnp.float32),                    # l
                pltpu.VMEM((num_heads, q_tile, cv_pad), jnp.float32),               # acc
            ],
        ),
        compiler_params=pltpu.CompilerParams(
            dimension_semantics=("parallel", "arbitrary", "arbitrary"),
            vmem_limit_bytes=vmem_limit_bytes,
        ),
    )(xq_p, xkv_p, wq_p, bq_p, wk_p, bk_p, wv_p, bv_p, wo_h, bo_p)

    return out[:, :N, :Co]


def multi_head_attention_ref(x_q, x_kv, params, *, num_heads):
    """Pure-JAX f32 reference mirroring the PyTorch forward."""
    wq, bq, wk, bk, wv, bv, wo, bo = params
    q = x_q @ wq + bq
    k = x_kv @ wk + bk
    v = x_kv @ wv + bv

    def split_heads(t):
        B, S, C = t.shape
        return t.reshape(B, S, num_heads, C // num_heads).transpose(0, 2, 1, 3)

    q, k, v = split_heads(q), split_heads(k), split_heads(v)
    q = q * (q.shape[-1] ** -0.5)
    attn = jnp.einsum("bhic,bhjc->bhij", q, k)
    attn = jax.nn.softmax(attn, axis=-1)
    o = jnp.einsum("bhij,bhjc->bhic", attn, v)
    B, H, N, C = o.shape
    o = o.transpose(0, 2, 1, 3).reshape(B, N, H * C)
    return o @ wo + bo


if __name__ == "__main__":
    # Module config (synthetic, deterministic init)
    num_heads = 4
    num_q_input_channels = 32
    num_kv_input_channels = 32
    num_qk_channels = 32   # defaults to num_q_input_channels
    num_v_channels = 32    # defaults to num_qk_channels
    num_output_channels = 32

    key = jax.random.PRNGKey(0)
    ks = jax.random.split(key, 10)

    def init_linear(kw, kb, fan_in, fan_out):
        bound = 1.0 / (fan_in ** 0.5)
        w = jax.random.uniform(kw, (fan_in, fan_out), jnp.float32, -bound, bound)
        b = jax.random.uniform(kb, (fan_out,), jnp.float32, -bound, bound)
        return w, b

    wq, bq = init_linear(ks[0], ks[1], num_q_input_channels, num_qk_channels)
    wk, bk = init_linear(ks[2], ks[3], num_kv_input_channels, num_qk_channels)
    wv, bv = init_linear(ks[4], ks[5], num_kv_input_channels, num_v_channels)
    wo, bo = init_linear(ks[6], ks[7], num_v_channels, num_output_channels)
    params = (wq, bq, wk, bk, wv, bv, wo, bo)

    # Case 1: module-default tiny shapes (single q/kv tile).
    B, N, L = 2, 8, 8
    x_q = jax.random.normal(ks[8], (B, N, num_q_input_channels), jnp.float32)
    x_kv = jax.random.normal(ks[9], (B, L, num_kv_input_channels), jnp.float32)
    out = jax.block_until_ready(multi_head_attention(x_q, x_kv, params, num_heads=num_heads))
    ref = multi_head_attention_ref(x_q, x_kv, params, num_heads=num_heads)
    assert out.shape == (B, N, num_output_channels)
    # bf16 MXU operands + approx reciprocal => looser tolerance than the pure-f32 path.
    assert jnp.allclose(out, ref, atol=2e-2, rtol=2e-2), "mismatch vs JAX reference (case 1)"

    # Case 2: exercise K/V-scratch reuse across q-tiles, online softmax across kv-tiles,
    # ragged N (query padding) and ragged L (key masking).
    B2, N2, L2 = 2, 12, 20
    kq2, kk2 = jax.random.split(jax.random.PRNGKey(1))
    x_q2 = jax.random.normal(kq2, (B2, N2, num_q_input_channels), jnp.float32)
    x_kv2 = jax.random.normal(kk2, (B2, L2, num_kv_input_channels), jnp.float32)
    out2 = jax.block_until_ready(
        multi_head_attention(x_q2, x_kv2, params, num_heads=num_heads, q_tile=8, l_tile=8))
    ref2 = multi_head_attention_ref(x_q2, x_kv2, params, num_heads=num_heads)
    assert out2.shape == (B2, N2, num_output_channels)
    assert jnp.allclose(out2, ref2, atol=2e-2, rtol=2e-2), "mismatch vs JAX reference (case 2)"

    print("KERNEL_OK")
</pallas_src>

<mosaic_0001>
module attributes {stable_mosaic.version = 11 : i64} {
  func.func @_mha_kernel(%arg0: i32, %arg1: i32, %arg2: i32, %arg3: memref<1x8x32xf32, #tpu.memory_space<vmem>>, %arg4: memref<1x8x32xf32, #tpu.memory_space<vmem>>, %arg5: memref<32x512xbf16, #tpu.memory_space<vmem>>, %arg6: memref<1x512xf32, #tpu.memory_space<vmem>>, %arg7: memref<32x512xbf16, #tpu.memory_space<vmem>>, %arg8: memref<1x512xf32, #tpu.memory_space<vmem>>, %arg9: memref<32x512xbf16, #tpu.memory_space<vmem>>, %arg10: memref<1x512xf32, #tpu.memory_space<vmem>>, %arg11: memref<4x128x128xbf16, #tpu.memory_space<vmem>>, %arg12: memref<1x128xf32, #tpu.memory_space<vmem>>, %arg13: memref<1x8x128xf32, #tpu.memory_space<vmem>>, %arg14: memref<4x8x128xbf16, #tpu.memory_space<vmem>>, %arg15: memref<1x4x8x128xbf16, #tpu.memory_space<vmem>>, %arg16: memref<1x4x8x128xbf16, #tpu.memory_space<vmem>>, %arg17: memref<4x8x1xf32, #tpu.memory_space<vmem>>, %arg18: memref<4x8x1xf32, #tpu.memory_space<vmem>>, %arg19: memref<4x8x128xf32, #tpu.memory_space<vmem>>) attributes {dimension_semantics = [#tpu.dimension_semantics<parallel>, #tpu.dimension_semantics<arbitrary>, #tpu.dimension_semantics<arbitrary>], iteration_bounds = array<i64: 2, 1, 1>, scalar_prefetch = 0 : i64, scratch_operands = 6 : i64, tpu.core_type = #tpu.core_type<tc>, window_params = [{transform_indices = @transform_0, window_bounds = array<i64: 1, 8, 32>}, {transform_indices = @transform_1, window_bounds = array<i64: 1, 8, 32>}, {pipeline_mode = #tpu.pipeline_mode<synchronous>, transform_indices = @transform_2, window_bounds = array<i64: 32, 512>}, {pipeline_mode = #tpu.pipeline_mode<synchronous>, transform_indices = @transform_3, window_bounds = array<i64: 1, 512>}, {pipeline_mode = #tpu.pipeline_mode<synchronous>, transform_indices = @transform_4, window_bounds = array<i64: 32, 512>}, {pipeline_mode = #tpu.pipeline_mode<synchronous>, transform_indices = @transform_5, window_bounds = array<i64: 1, 512>}, {pipeline_mode = #tpu.pipeline_mode<synchronous>, transform_indices = @transform_6, window_bounds = array<i64: 32, 512>}, {pipeline_mode = #tpu.pipeline_mode<synchronous>, transform_indices = @transform_7, window_bounds = array<i64: 1, 512>}, {pipeline_mode = #tpu.pipeline_mode<synchronous>, transform_indices = @transform_8, window_bounds = array<i64: 4, 128, 128>}, {pipeline_mode = #tpu.pipeline_mode<synchronous>, transform_indices = @transform_9, window_bounds = array<i64: 1, 128>}, {transform_indices = @transform_10, window_bounds = array<i64: 1, 8, 128>}]} {
    %c0_i32 = arith.constant 0 : i32
    %0 = arith.cmpi eq, %arg1, %c0_i32 : i32
    %1 = arith.extui %0 : i1 to i32
    %c0_i32_0 = arith.constant 0 : i32
    %2 = arith.cmpi ne, %1, %c0_i32_0 : i32
    scf.if %2 {
      %c0_34 = arith.constant 0 : index
      %c0_35 = arith.constant 0 : index
      %c0_36 = arith.constant 0 : index
      %40 = vector.load %arg4[%c0_34, %c0_35, %c0_36] : memref<1x8x32xf32, #tpu.memory_space<vmem>>, vector<1x8x32xf32>
      %41 = vector.shape_cast %40 : vector<1x8x32xf32> to vector<8x32xf32>
      %42 = arith.truncf %41 : vector<8x32xf32> to vector<8x32xbf16>
      %c0_37 = arith.constant 0 : index
      %c0_38 = arith.constant 0 : index
      %43 = vector.load %arg7[%c0_37, %c0_38] : memref<32x512xbf16, #tpu.memory_space<vmem>>, vector<32x512xbf16>
      %cst_39 = arith.constant dense<0.000000e+00> : vector<8x512xf32>
      %44 = tpu.matmul %42, %43, %cst_39 {dimension_numbers = #tpu.dot_dimension_numbers<[1], [0], [0], [1], [0, 0, 1, 1], [], []>} : vector<8x32xbf16>, vector<32x512xbf16>, vector<8x512xf32> -> vector<8x512xf32>
      %c0_40 = arith.constant 0 : index
      %c0_41 = arith.constant 0 : index
      %45 = vector.load %arg8[%c0_40, %c0_41] : memref<1x512xf32, #tpu.memory_space<vmem>>, vector<1x512xf32>
      %46 = vector.broadcast %45 : vector<1x512xf32> to vector<8x512xf32>
      %47 = arith.addf %44, %46 : vector<8x512xf32>
      %c0_42 = arith.constant 0 : index
      %c0_43 = arith.constant 0 : index
      %48 = vector.load %arg9[%c0_42, %c0_43] : memref<32x512xbf16, #tpu.memory_space<vmem>>, vector<32x512xbf16>
      %cst_44 = arith.constant dense<0.000000e+00> : vector<8x512xf32>
      %49 = tpu.matmul %42, %48, %cst_44 {dimension_numbers = #tpu.dot_dimension_numbers<[1], [0], [0], [1], [0, 0, 1, 1], [], []>} : vector<8x32xbf16>, vector<32x512xbf16>, vector<8x512xf32> -> vector<8x512xf32>
      %c0_45 = arith.constant 0 : index
      %c0_46 = arith.constant 0 : index
      %50 = vector.load %arg10[%c0_45, %c0_46] : memref<1x512xf32, #tpu.memory_space<vmem>>, vector<1x512xf32>
      %51 = vector.broadcast %50 : vector<1x512xf32> to vector<8x512xf32>
      %52 = arith.addf %49, %51 : vector<8x512xf32>
      %53 = arith.truncf %47 : vector<8x512xf32> to vector<8x512xbf16>
      %54 = vector.shape_cast %53 : vector<8x512xbf16> to vector<8x4x128xbf16>
      %55 = tpu.transpose %54, [1, 0, 2] : vector<8x4x128xbf16> -> vector<4x8x128xbf16>
      %56 = arith.index_cast %arg2 : i32 to index
      %c0_47 = arith.constant 0 : index
      %c0_48 = arith.constant 0 : index
      %c0_49 = arith.constant 0 : index
      %57 = vector.load %arg15[%56, %c0_47, %c0_48, %c0_49] : memref<1x4x8x128xbf16, #tpu.memory_space<vmem>>, vector<1x4x8x128xbf16>
      %58 = vector.shape_cast %57 : vector<1x4x8x128xbf16> to vector<4x8x128xbf16>
      %59 = vector.shape_cast %55 : vector<4x8x128xbf16> to vector<1x4x8x128xbf16>
      tpu.vector_store %arg15[%56, %c0_47, %c0_48, %c0_49], %59 {strides = array<i32>} : memref<1x4x8x128xbf16, #tpu.memory_space<vmem>>, vector<1x4x8x128xbf16>,
      %60 = arith.truncf %52 : vector<8x512xf32> to vector<8x512xbf16>
      %61 = vector.shape_cast %60 : vector<8x512xbf16> to vector<8x4x128xbf16>
      %62 = tpu.transpose %61, [1, 0, 2] : vector<8x4x128xbf16> -> vector<4x8x128xbf16>
      %63 = arith.index_cast %arg2 : i32 to index
      %c0_50 = arith.constant 0 : index
      %c0_51 = arith.constant 0 : index
      %c0_52 = arith.constant 0 : index
      %64 = vector.load %arg16[%63, %c0_50, %c0_51, %c0_52] : memref<1x4x8x128xbf16, #tpu.memory_space<vmem>>, vector<1x4x8x128xbf16>
      %65 = vector.shape_cast %64 : vector<1x4x8x128xbf16> to vector<4x8x128xbf16>
      %66 = vector.shape_cast %62 : vector<4x8x128xbf16> to vector<1x4x8x128xbf16>
      tpu.vector_store %arg16[%63, %c0_50, %c0_51, %c0_52], %66 {strides = array<i32>} : memref<1x4x8x128xbf16, #tpu.memory_space<vmem>>, vector<1x4x8x128xbf16>,
    } else {
    }
    %c0_i32_1 = arith.constant 0 : i32
    %3 = arith.cmpi eq, %arg2, %c0_i32_1 : i32
    %4 = arith.extui %3 : i1 to i32
    %c0_i32_2 = arith.constant 0 : i32
    %5 = arith.cmpi ne, %4, %c0_i32_2 : i32
    scf.if %5 {
      %c0_34 = arith.constant 0 : index
      %c0_35 = arith.constant 0 : index
      %c0_36 = arith.constant 0 : index
      %40 = vector.load %arg3[%c0_34, %c0_35, %c0_36] : memref<1x8x32xf32, #tpu.memory_space<vmem>>, vector<1x8x32xf32>
      %41 = vector.shape_cast %40 : vector<1x8x32xf32> to vector<8x32xf32>
      %42 = arith.truncf %41 : vector<8x32xf32> to vector<8x32xbf16>
      %c0_37 = arith.constant 0 : index
      %c0_38 = arith.constant 0 : index
      %43 = vector.load %arg5[%c0_37, %c0_38] : memref<32x512xbf16, #tpu.memory_space<vmem>>, vector<32x512xbf16>
      %cst_39 = arith.constant dense<0.000000e+00> : vector<8x512xf32>
      %44 = tpu.matmul %42, %43, %cst_39 {dimension_numbers = #tpu.dot_dimension_numbers<[1], [0], [0], [1], [0, 0, 1, 1], [], []>} : vector<8x32xbf16>, vector<32x512xbf16>, vector<8x512xf32> -> vector<8x512xf32>
      %c0_40 = arith.constant 0 : index
      %c0_41 = arith.constant 0 : index
      %45 = vector.load %arg6[%c0_40, %c0_41] : memref<1x512xf32, #tpu.memory_space<vmem>>, vector<1x512xf32>
      %46 = vector.broadcast %45 : vector<1x512xf32> to vector<8x512xf32>
      %47 = arith.addf %44, %46 : vector<8x512xf32>
      %48 = arith.truncf %47 : vector<8x512xf32> to vector<8x512xbf16>
      %49 = vector.shape_cast %48 : vector<8x512xbf16> to vector<8x4x128xbf16>
      %50 = tpu.transpose %49, [1, 0, 2] : vector<8x4x128xbf16> -> vector<4x8x128xbf16>
      %c0_42 = arith.constant 0 : index
      %c0_43 = arith.constant 0 : index
      %c0_44 = arith.constant 0 : index
      %51 = vector.load %arg14[%c0_42, %c0_43, %c0_44] : memref<4x8x128xbf16, #tpu.memory_space<vmem>>, vector<4x8x128xbf16>
      tpu.vector_store %arg14[%c0_42, %c0_43, %c0_44], %50 {strides = array<i32>} : memref<4x8x128xbf16, #tpu.memory_space<vmem>>, vector<4x8x128xbf16>,
      %cst_45 = arith.constant 0xFF800000 : f32
      %52 = vector.broadcast %cst_45 : f32 to vector<4x8x1xf32>
      %c0_46 = arith.constant 0 : index
      %c0_47 = arith.constant 0 : index
      %c0_48 = arith.constant 0 : index
      %53 = vector.load %arg17[%c0_46, %c0_47, %c0_48] : memref<4x8x1xf32, #tpu.memory_space<vmem>>, vector<4x8x1xf32>
      tpu.vector_store %arg17[%c0_46, %c0_47, %c0_48], %52 {strides = array<i32>} : memref<4x8x1xf32, #tpu.memory_space<vmem>>, vector<4x8x1xf32>,
      %cst_49 = arith.constant 0.000000e+00 : f32
      %54 = vector.broadcast %cst_49 : f32 to vector<4x8x1xf32>
      %c0_50 = arith.constant 0 : index
      %c0_51 = arith.constant 0 : index
      %c0_52 = arith.constant 0 : index
      %55 = vector.load %arg18[%c0_50, %c0_51, %c0_52] : memref<4x8x1xf32, #tpu.memory_space<vmem>>, vector<4x8x1xf32>
      tpu.vector_store %arg18[%c0_50, %c0_51, %c0_52], %54 {strides = array<i32>} : memref<4x8x1xf32, #tpu.memory_space<vmem>>, vector<4x8x1xf32>,
      %cst_53 = arith.constant 0.000000e+00 : f32
      %56 = vector.broadcast %cst_53 : f32 to vector<4x8x128xf32>
      %c0_54 = arith.constant 0 : index
      %c0_55 = arith.constant 0 : index
      %c0_56 = arith.constant 0 : index
      %57 = vector.load %arg19[%c0_54, %c0_55, %c0_56] : memref<4x8x128xf32, #tpu.memory_space<vmem>>, vector<4x8x128xf32>
      tpu.vector_store %arg19[%c0_54, %c0_55, %c0_56], %56 {strides = array<i32>} : memref<4x8x128xf32, #tpu.memory_space<vmem>>, vector<4x8x128xf32>,
    } else {
    }
    %c0 = arith.constant 0 : index
    %c0_3 = arith.constant 0 : index
    %c0_4 = arith.constant 0 : index
    %6 = vector.load %arg14[%c0, %c0_3, %c0_4] : memref<4x8x128xbf16, #tpu.memory_space<vmem>>, vector<4x8x128xbf16>
    %7 = arith.index_cast %arg2 : i32 to index
    %c0_5 = arith.constant 0 : index
    %c0_6 = arith.constant 0 : index
    %c0_7 = arith.constant 0 : index
    %8 = vector.load %arg15[%7, %c0_5, %c0_6, %c0_7] : memref<1x4x8x128xbf16, #tpu.memory_space<vmem>>, vector<1x4x8x128xbf16>
    %9 = vector.shape_cast %8 : vector<1x4x8x128xbf16> to vector<4x8x128xbf16>
    %10 = arith.index_cast %arg2 : i32 to index
    %c0_8 = arith.constant 0 : index
    %c0_9 = arith.constant 0 : index
    %c0_10 = arith.constant 0 : index
    %11 = vector.load %arg16[%10, %c0_8, %c0_9, %c0_10] : memref<1x4x8x128xbf16, #tpu.memory_space<vmem>>, vector<1x4x8x128xbf16>
    %12 = vector.shape_cast %11 : vector<1x4x8x128xbf16> to vector<4x8x128xbf16>
    "tpu.trace_start"() <{level = 10 : i32, message = "hnc,hlc->hnl"}> : () -> ()
    %cst = arith.constant dense<0.000000e+00> : vector<4x8x8xf32>
    %13 = tpu.matmul %6, %9, %cst {dimension_numbers = #tpu.dot_dimension_numbers<[2], [2], [1], [1], [0, 0, 0, 1, 1, 1], [0], [0]>} : vector<4x8x128xbf16>, vector<4x8x128xbf16>, vector<4x8x8xf32> -> vector<4x8x8xf32>
    "tpu.trace_stop"() : () -> ()
    %c0_11 = arith.constant 0 : index
    %c0_12 = arith.constant 0 : index
    %c0_13 = arith.constant 0 : index
    %14 = vector.load %arg17[%c0_11, %c0_12, %c0_13] : memref<4x8x1xf32, #tpu.memory_space<vmem>>, vector<4x8x1xf32>
    %cst_14 = arith.constant dense<0xFF800000> : vector<4x8xf32>
    %15 = vector.multi_reduction <maximumf>, %13, %cst_14 [2] : vector<4x8x8xf32> to vector<4x8xf32>
    %16 = vector.shape_cast %15 : vector<4x8xf32> to vector<4x8x1xf32>
    %17 = arith.maximumf %14, %16 : vector<4x8x1xf32>
    %18 = arith.subf %14, %17 : vector<4x8x1xf32>
    %19 = math.exp %18 : vector<4x8x1xf32>
    %20 = vector.broadcast %17 : vector<4x8x1xf32> to vector<4x8x8xf32>
    %21 = arith.subf %13, %20 : vector<4x8x8xf32>
    %22 = math.exp %21 : vector<4x8x8xf32>
    %c0_15 = arith.constant 0 : index
    %c0_16 = arith.constant 0 : index
    %c0_17 = arith.constant 0 : index
    %23 = vector.load %arg18[%c0_15, %c0_16, %c0_17] : memref<4x8x1xf32, #tpu.memory_space<vmem>>, vector<4x8x1xf32>
    %24 = arith.mulf %19, %23 : vector<4x8x1xf32>
    %cst_18 = arith.constant dense<0.000000e+00> : vector<4x8xf32>
    %25 = vector.multi_reduction <add>, %22, %cst_18 [2] : vector<4x8x8xf32> to vector<4x8xf32>
    %26 = vector.shape_cast %25 : vector<4x8xf32> to vector<4x8x1xf32>
    %27 = arith.addf %24, %26 : vector<4x8x1xf32>
    %c0_19 = arith.constant 0 : index
    %c0_20 = arith.constant 0 : index
    %c0_21 = arith.constant 0 : index
    %28 = vector.load %arg18[%c0_19, %c0_20, %c0_21] : memref<4x8x1xf32, #tpu.memory_space<vmem>>, vector<4x8x1xf32>
    tpu.vector_store %arg18[%c0_19, %c0_20, %c0_21], %27 {strides = array<i32>} : memref<4x8x1xf32, #tpu.memory_space<vmem>>, vector<4x8x1xf32>,
    %c0_22 = arith.constant 0 : index
    %c0_23 = arith.constant 0 : index
    %c0_24 = arith.constant 0 : index
    %29 = vector.load %arg19[%c0_22, %c0_23, %c0_24] : memref<4x8x128xf32, #tpu.memory_space<vmem>>, vector<4x8x128xf32>
    %30 = vector.broadcast %19 : vector<4x8x1xf32> to vector<4x8x128xf32>
    %31 = arith.mulf %30, %29 : vector<4x8x128xf32>
    %32 = arith.truncf %22 : vector<4x8x8xf32> to vector<4x8x8xbf16>
    "tpu.trace_start"() <{level = 10 : i32, message = "hnl,hlc->hnc"}> : () -> ()
    %cst_25 = arith.constant dense<0.000000e+00> : vector<4x8x128xf32>
    %33 = tpu.matmul %32, %12, %cst_25 {dimension_numbers = #tpu.dot_dimension_numbers<[2], [1], [1], [2], [0, 0, 0, 1, 1, 2], [0], [0]>} : vector<4x8x8xbf16>, vector<4x8x128xbf16>, vector<4x8x128xf32> -> vector<4x8x128xf32>
    "tpu.trace_stop"() : () -> ()
    %34 = arith.addf %31, %33 : vector<4x8x128xf32>
    %c0_26 = arith.constant 0 : index
    %c0_27 = arith.constant 0 : index
    %c0_28 = arith.constant 0 : index
    %35 = vector.load %arg19[%c0_26, %c0_27, %c0_28] : memref<4x8x128xf32, #tpu.memory_space<vmem>>, vector<4x8x128xf32>
    tpu.vector_store %arg19[%c0_26, %c0_27, %c0_28], %34 {strides = array<i32>} : memref<4x8x128xf32, #tpu.memory_space<vmem>>, vector<4x8x128xf32>,
    %c0_29 = arith.constant 0 : index
    %c0_30 = arith.constant 0 : index
    %c0_31 = arith.constant 0 : index
    %36 = vector.load %arg17[%c0_29, %c0_30, %c0_31] : memref<4x8x1xf32, #tpu.memory_space<vmem>>, vector<4x8x1xf32>
    tpu.vector_store %arg17[%c0_29, %c0_30, %c0_31], %17 {strides = array<i32>} : memref<4x8x1xf32, #tpu.memory_space<vmem>>, vector<4x8x1xf32>,
    %c0_i32_32 = arith.constant 0 : i32
    %37 = arith.cmpi eq, %arg2, %c0_i32_32 : i32
    %38 = arith.extui %37 : i1 to i32
    %c0_i32_33 = arith.constant 0 : i32
    %39 = arith.cmpi ne, %38, %c0_i32_33 : i32
    scf.if %39 {
      %c0_34 = arith.constant 0 : index
      %c0_35 = arith.constant 0 : index
      %c0_36 = arith.constant 0 : index
      %40 = vector.load %arg19[%c0_34, %c0_35, %c0_36] : memref<4x8x128xf32, #tpu.memory_space<vmem>>, vector<4x8x128xf32>
      %c0_37 = arith.constant 0 : index
      %c0_38 = arith.constant 0 : index
      %c0_39 = arith.constant 0 : index
      %41 = vector.load %arg18[%c0_37, %c0_38, %c0_39] : memref<4x8x1xf32, #tpu.memory_space<vmem>>, vector<4x8x1xf32>
      %42 = tpu.reciprocal %41 {approx = true} : vector<4x8x1xf32> -> vector<4x8x1xf32>
      %43 = vector.broadcast %42 : vector<4x8x1xf32> to vector<4x8x128xf32>
      %44 = arith.mulf %40, %43 : vector<4x8x128xf32>
      %cst_40 = arith.constant 0.000000e+00 : f32
      %45 = vector.broadcast %cst_40 : f32 to vector<8x128xf32>
      %46 = vector.extract_strided_slice %44 {offsets = [0, 0, 0], sizes = [1, 8, 128], strides = [1, 1, 1]} : vector<4x8x128xf32> to vector<1x8x128xf32>
      %47 = vector.shape_cast %46 : vector<1x8x128xf32> to vector<8x128xf32>
      %48 = arith.truncf %47 : vector<8x128xf32> to vector<8x128xbf16>
      %c0_41 = arith.constant 0 : index
      %c0_42 = arith.constant 0 : index
      %c0_43 = arith.constant 0 : index
      %49 = vector.load %arg11[%c0_41, %c0_42, %c0_43] : memref<4x128x128xbf16, #tpu.memory_space<vmem>>, vector<1x128x128xbf16>
      %50 = vector.shape_cast %49 : vector<1x128x128xbf16> to vector<128x128xbf16>
      %cst_44 = arith.constant dense<0.000000e+00> : vector<8x128xf32>
      %51 = tpu.matmul %48, %50, %cst_44 {dimension_numbers = #tpu.dot_dimension_numbers<[1], [0], [0], [1], [0, 0, 1, 1], [], []>} : vector<8x128xbf16>, vector<128x128xbf16>, vector<8x128xf32> -> vector<8x128xf32>
      %52 = arith.addf %45, %51 : vector<8x128xf32>
      %53 = vector.extract_strided_slice %44 {offsets = [1, 0, 0], sizes = [1, 8, 128], strides = [1, 1, 1]} : vector<4x8x128xf32> to vector<1x8x128xf32>
      %54 = vector.shape_cast %53 : vector<1x8x128xf32> to vector<8x128xf32>
      %55 = arith.truncf %54 : vector<8x128xf32> to vector<8x128xbf16>
      %c1 = arith.constant 1 : index
      %c0_45 = arith.constant 0 : index
      %c0_46 = arith.constant 0 : index
      %56 = vector.load %arg11[%c1, %c0_45, %c0_46] : memref<4x128x128xbf16, #tpu.memory_space<vmem>>, vector<1x128x128xbf16>
      %57 = vector.shape_cast %56 : vector<1x128x128xbf16> to vector<128x128xbf16>
      %cst_47 = arith.constant dense<0.000000e+00> : vector<8x128xf32>
      %58 = tpu.matmul %55, %57, %cst_47 {dimension_numbers = #tpu.dot_dimension_numbers<[1], [0], [0], [1], [0, 0, 1, 1], [], []>} : vector<8x128xbf16>, vector<128x128xbf16>, vector<8x128xf32> -> vector<8x128xf32>
      %59 = arith.addf %52, %58 : vector<8x128xf32>
      %60 = vector.extract_strided_slice %44 {offsets = [2, 0, 0], sizes = [1, 8, 128], strides = [1, 1, 1]} : vector<4x8x128xf32> to vector<1x8x128xf32>
      %61 = vector.shape_cast %60 : vector<1x8x128xf32> to vector<8x128xf32>
      %62 = arith.truncf %61 : vector<8x128xf32> to vector<8x128xbf16>
      %c2 = arith.constant 2 : index
      %c0_48 = arith.constant 0 : index
      %c0_49 = arith.constant 0 : index
      %63 = vector.load %arg11[%c2, %c0_48, %c0_49] : memref<4x128x128xbf16, #tpu.memory_space<vmem>>, vector<1x128x128xbf16>
      %64 = vector.shape_cast %63 : vector<1x128x128xbf16> to vector<128x128xbf16>
      %cst_50 = arith.constant dense<0.000000e+00> : vector<8x128xf32>
      %65 = tpu.matmul %62, %64, %cst_50 {dimension_numbers = #tpu.dot_dimension_numbers<[1], [0], [0], [1], [0, 0, 1, 1], [], []>} : vector<8x128xbf16>, vector<128x128xbf16>, vector<8x128xf32> -> vector<8x128xf32>
      %66 = arith.addf %59, %65 : vector<8x128xf32>
      %67 = vector.extract_strided_slice %44 {offsets = [3, 0, 0], sizes = [1, 8, 128], strides = [1, 1, 1]} : vector<4x8x128xf32> to vector<1x8x128xf32>
      %68 = vector.shape_cast %67 : vector<1x8x128xf32> to vector<8x128xf32>
      %69 = arith.truncf %68 : vector<8x128xf32> to vector<8x128xbf16>
      %c3 = arith.constant 3 : index
      %c0_51 = arith.constant 0 : index
      %c0_52 = arith.constant 0 : index
      %70 = vector.load %arg11[%c3, %c0_51, %c0_52] : memref<4x128x128xbf16, #tpu.memory_space<vmem>>, vector<1x128x128xbf16>
      %71 = vector.shape_cast %70 : vector<1x128x128xbf16> to vector<128x128xbf16>
      %cst_53 = arith.constant dense<0.000000e+00> : vector<8x128xf32>
      %72 = tpu.matmul %69, %71, %cst_53 {dimension_numbers = #tpu.dot_dimension_numbers<[1], [0], [0], [1], [0, 0, 1, 1], [], []>} : vector<8x128xbf16>, vector<128x128xbf16>, vector<8x128xf32> -> vector<8x128xf32>
      %73 = arith.addf %66, %72 : vector<8x128xf32>
      %c0_54 = arith.constant 0 : index
      %c0_55 = arith.constant 0 : index
      %74 = vector.load %arg12[%c0_54, %c0_55] : memref<1x128xf32, #tpu.memory_space<vmem>>, vector<1x128xf32>
      %75 = vector.broadcast %74 : vector<1x128xf32> to vector<8x128xf32>
      %76 = arith.addf %73, %75 : vector<8x128xf32>
      %c0_56 = arith.constant 0 : index
      %c0_57 = arith.constant 0 : index
      %c0_58 = arith.constant 0 : index
      %77 = vector.load %arg13[%c0_56, %c0_57, %c0_58] : memref<1x8x128xf32, #tpu.memory_space<vmem>>, vector<1x8x128xf32>
      %78 = vector.shape_cast %77 : vector<1x8x128xf32> to vector<8x128xf32>
      %79 = vector.shape_cast %76 : vector<8x128xf32> to vector<1x8x128xf32>
      tpu.vector_store %arg13[%c0_56, %c0_57, %c0_58], %79 {strides = array<i32>} : memref<1x8x128xf32, #tpu.memory_space<vmem>>, vector<1x8x128xf32>,
    } else {
    }
    return
  }
  func.func @transform_0(%arg0: i32, %arg1: i32, %arg2: i32) -> (i32, i32, i32) {
    %c0_i32 = arith.constant 0 : i32
    %c0_i32_0 = arith.constant 0 : i32
    return %arg0, %arg1, %c0_i32 : i32, i32, i32
  }
  func.func @transform_1(%arg0: i32, %arg1: i32, %arg2: i32) -> (i32, i32, i32) {
    %c0_i32 = arith.constant 0 : i32
    %c0_i32_0 = arith.constant 0 : i32
    return %arg0, %arg2, %c0_i32 : i32, i32, i32
  }
  func.func @transform_2(%arg0: i32, %arg1: i32, %arg2: i32) -> (i32, i32) {
    %c0_i32 = arith.constant 0 : i32
    %c0_i32_0 = arith.constant 0 : i32
    %c0_i32_1 = arith.constant 0 : i32
    return %c0_i32, %c0_i32_0 : i32, i32
  }
  func.func @transform_3(%arg0: i32, %arg1: i32, %arg2: i32) -> (i32, i32) {
    %c0_i32 = arith.constant 0 : i32
    %c0_i32_0 = arith.constant 0 : i32
    %c0_i32_1 = arith.constant 0 : i32
    return %c0_i32, %c0_i32_0 : i32, i32
  }
  func.func @transform_4(%arg0: i32, %arg1: i32, %arg2: i32) -> (i32, i32) {
    %c0_i32 = arith.constant 0 : i32
    %c0_i32_0 = arith.constant 0 : i32
    %c0_i32_1 = arith.constant 0 : i32
    return %c0_i32, %c0_i32_0 : i32, i32
  }
  func.func @transform_5(%arg0: i32, %arg1: i32, %arg2: i32) -> (i32, i32) {
    %c0_i32 = arith.constant 0 : i32
    %c0_i32_0 = arith.constant 0 : i32
    %c0_i32_1 = arith.constant 0 : i32
    return %c0_i32, %c0_i32_0 : i32, i32
  }
  func.func @transform_6(%arg0: i32, %arg1: i32, %arg2: i32) -> (i32, i32) {
    %c0_i32 = arith.constant 0 : i32
    %c0_i32_0 = arith.constant 0 : i32
    %c0_i32_1 = arith.constant 0 : i32
    return %c0_i32, %c0_i32_0 : i32, i32
  }
  func.func @transform_7(%arg0: i32, %arg1: i32, %arg2: i32) -> (i32, i32) {
    %c0_i32 = arith.constant 0 : i32
    %c0_i32_0 = arith.constant 0 : i32
    %c0_i32_1 = arith.constant 0 : i32
    return %c0_i32, %c0_i32_0 : i32, i32
  }
  func.func @transform_8(%arg0: i32, %arg1: i32, %arg2: i32) -> (i32, i32, i32) {
    %c0_i32 = arith.constant 0 : i32
    %c0_i32_0 = arith.constant 0 : i32
    %c0_i32_1 = arith.constant 0 : i32
    %c0_i32_2 = arith.constant 0 : i32
    return %c0_i32, %c0_i32_0, %c0_i32_1 : i32, i32, i32
  }
  func.func @transform_9(%arg0: i32, %arg1: i32, %arg2: i32) -> (i32, i32) {
    %c0_i32 = arith.constant 0 : i32
    %c0_i32_0 = arith.constant 0 : i32
    %c0_i32_1 = arith.constant 0 : i32
    return %c0_i32, %c0_i32_0 : i32, i32
  }
  func.func @transform_10(%arg0: i32, %arg1: i32, %arg2: i32) -> (i32, i32, i32) {
    %c0_i32 = arith.constant 0 : i32
    %c0_i32_0 = arith.constant 0 : i32
    return %arg0, %arg1, %c0_i32 : i32, i32, i32
  }
}

</mosaic_0001>

<llo_original>
// kernel: tpu_custom_call.1
$region0: #{tpu_custom_call.1}
  #allocation0 [shape = 'u32[]', space=smem, size = 0x4, offset = 0x4, fixed_abs, tag = 'smem constant byte address 0x4 - core index']
  #allocation1 [shape = 'u32[144,128]{1,0:T(1,128)}', space=vmem, size = 0x12000, scoped, tag = 'internal scratch']
  #allocation2 [shape = 'bf16[4,8,128]{2,1,0:T(8,128)(2,1)}', space=vmem, size = 0x2000, scoped, tag = 'scratch operand']
  #allocation3 [shape = 'bf16[1,4,8,128]{3,2,1,0:T(8,128)(2,1)}', space=vmem, size = 0x2000, scoped, tag = 'scratch operand']
  #allocation4 [shape = 'bf16[1,4,8,128]{3,2,1,0:T(8,128)(2,1)}', space=vmem, size = 0x2000, scoped, tag = 'scratch operand']
  #allocation5 [shape = 'f32[4,8,1]{2,1,0:T(8,128)}', space=vmem, size = 0x4000, scoped, tag = 'scratch operand']
  #allocation6 [shape = 'f32[4,8,1]{2,1,0:T(8,128)}', space=vmem, size = 0x4000, scoped, tag = 'scratch operand']
  #allocation7 [shape = 'f32[4,8,128]{2,1,0:T(8,128)}', space=vmem, size = 0x4000, scoped, tag = 'scratch operand']
  %s0 = inlined_call_operand.hbm [shape: f32[2,8,32], index: 0, kind: input, shape index: {}]
  %s1 = inlined_call_operand.hbm [shape: f32[2,8,32], index: 1, kind: input, shape index: {}]
  %s2 = inlined_call_operand.hbm [shape: bf16[32,512], index: 2, kind: input, shape index: {}]
  %s3 = inlined_call_operand.vmem [shape: f32[1,512], index: 3, kind: input, shape index: {}]
  %s4 = inlined_call_operand.hbm [shape: bf16[32,512], index: 4, kind: input, shape index: {}]
  %s5 = inlined_call_operand.vmem [shape: f32[1,512], index: 5, kind: input, shape index: {}]
  %s6 = inlined_call_operand.hbm [shape: bf16[32,512], index: 6, kind: input, shape index: {}]
  %s7 = inlined_call_operand.vmem [shape: f32[1,512], index: 7, kind: input, shape index: {}]
  %s8 = inlined_call_operand.hbm [shape: bf16[4,128,128], index: 8, kind: input, shape index: {}]
  %s9 = inlined_call_operand.vmem [shape: f32[1,128], index: 9, kind: input, shape index: {}]
  %s10 = inlined_call_operand.hbm [shape: f32[2,8,128], index: 10, kind: output, shape index: {}]
  %s11 = sld [smem:[#allocation0]]
  $region109: #{tpu_custom_call.1} parent=0
    _
  %s13 = ssub.s32 1, %s11
  %s14 = scalar_select 0, %s13, %s11
  $region1: #{tpu_custom_call.1} parent=0
    #allocation8 [shape = 'u8[8192]{0}', space=vmem, size = 0x2000, scoped, tag = 'input window, operand 0']
    #allocation9 [shape = 's32[2]{0}', space=sflag, size = 0x8, scoped, tag = 'scoped memory for tpu_custom_call.1']
    #allocation10 [shape = 's32[2]{0}', space=sflag, size = 0x8, scoped, tag = 'scoped memory for tpu_custom_call.1']
    #allocation11 [shape = 'u8[8192]{0}', space=vmem, size = 0x2000, scoped, tag = 'input window, operand 1']
    #allocation12 [shape = 's32[2]{0}', space=sflag, size = 0x8, scoped, tag = 'scoped memory for tpu_custom_call.1']
    #allocation13 [shape = 'u8[32768]{0}', space=vmem, size = 0x8000, scoped, tag = 'input window, operand 2, single buffered']
    #allocation14 [shape = 'u8[32768]{0}', space=vmem, size = 0x8000, scoped, tag = 'input window, operand 4, single buffered']
    #allocation15 [shape = 's32[1]{0}', space=sflag, size = 0x4, scoped, tag = 'scoped memory for tpu_custom_call.1']
    #allocation16 [shape = 'u8[32768]{0}', space=vmem, size = 0x8000, scoped, tag = 'input window, operand 6, single buffered']
    #allocation17 [shape = 'u8[131072]{0}', space=vmem, size = 0x20000, scoped, tag = 'input window, operand 8, single buffered']
    #allocation18 [shape = 's32[1]{0}', space=sflag, size = 0x4, scoped, tag = 'scoped memory for tpu_custom_call.1']
    #allocation19 [shape = 'u8[8192]{0}', space=vmem, size = 0x2000, scoped, tag = 'output window, operand 0']
    %15 = vsyncpa [#allocation9], 0
    %s16 = scalar_lea.sflag [#allocation9], 1
    %17 = vsyncpa %s16, 0
    %18 = vsyncpa [#allocation12], 0
    %s19 = scalar_lea.sflag [#allocation12], 1
    %20 = vsyncpa %s19, 0
    %21 = vsyncpa [#allocation15], 0
    %22 = vsyncpa [#allocation18], 0
    %23 = vsyncpa [#allocation10], 0
    %s24 = scalar_lea.sflag [#allocation10], 1
    %25 = vsyncpa %s24, 0
    loop: start=0, step=1, limit=4
    $region2: #{tpu_custom_call.1} parent=1 // loop_pre_header
      _
    $region3: #{tpu_custom_call.1} parent=1 // loop_header
      %s27 = sphi 0, %s31
      %p28 = scmp.ge.s32.totalorder %s27, 4
      %s34 = sphi 0, %s53
      %s35 = sphi 0, %s49
      %s36 = sphi 0, %s45
      %s37 = sphi 0, %s34
      %s38 = sphi 0, %s35
      %s39 = sphi 0, %s36
      %s40 = sphi 0, %s37
      %s41 = sphi 0, %s38
      %s42 = sphi 0, %s39
      %s58 = sphi 0, %s60
      %s61 = sphi 0, %s58
      %s62 = sphi 0, %s61
      %s78 = sphi 0, %s62
      %s86 = sphi 0, %s88
      %s89 = sphi 0, %s86
      %s90 = sphi 0, %s89
      %s106 = sphi 0, %s90
      %s110 = sphi 0, %s110
      %s112 = sphi 0, %s110
      %s113 = sphi 0, %s112
      %s127 = sphi 0, %s113
      %s131 = sphi 0, %s131
      %s133 = sphi 0, %s131
      %s134 = sphi 0, %s133
      %s148 = sphi 0, %s134
      %s152 = sphi 0, %s152
      %s154 = sphi 0, %s152
      %s155 = sphi 0, %s154
      %s169 = sphi 0, %s155
      %s173 = sphi 0, %s173
      %s175 = sphi 0, %s173
      %s176 = sphi 0, %s175
      %s190 = sphi 0, %s176
      %s194 = sphi 0, %s194
      %s196 = sphi 0, %s194
      %s197 = sphi 0, %s196
      %s211 = sphi 0, %s197
      %s215 = sphi 0, %s215
      %s217 = sphi 0, %s215
      %s218 = sphi 0, %s217
      %s232 = sphi 0, %s218
      %s236 = sphi 0, %s236
      %s238 = sphi 0, %s236
      %s239 = sphi 0, %s238
      %s253 = sphi 0, %s239
      %s257 = sphi 0, %s257
      %s259 = sphi 0, %s257
      %s260 = sphi 0, %s259
      %s274 = sphi 0, %s260
      %s282 = sphi 0, %s284
      %s285 = sphi 0, %s282
      %s286 = sphi 0, %s285
      %s302 = sphi 0, %s286
    $region4: #{tpu_custom_call.1} parent=1 // loop_header_branch
      %30 = sbr.rel (%p28) target = $region8
    $region5: #{tpu_custom_call.1} parent=1 // loop_body
      %s32 = ssub.s32 %s27, 1
      %s33 = ssub.s32 %s27, 2
      %s43 = sadd.s32 1, %s36
      %p44 = scmp.ge.s32.totalorder %s43, 1
      %s45 = scalar_select %p44, 0, %s43
      %s46 = sadd.s32 1, %s35
      %s47 = scalar_select %p44, %s46, %s35
      %p48 = scmp.ge.s32.totalorder %s47, 1
      %s49 = scalar_select %p48, 0, %s47
      %s50 = sadd.s32 1, %s34
      %s51 = scalar_select %p48, %s50, %s34
      %p52 = scmp.ge.s32.totalorder %s51, 2
      %s53 = scalar_select %p52, 0, %s51
      %s54 = ssub.s32 %s34, %s53
      %s55 = ssub.s32 %s35, %s49
      %s56 = sor.u32 %s54, %s55
      %p57 = scmp.eq.s32.totalorder %s56, 0
      %s59 = sadd.s32 %s58, 1
      %s60 = scalar_select %p57, %s58, %s59
      %p63 = pneg %p57
      %p64 = scmp.eq.s32.totalorder %s27, 1
      %p65 = por %p63, %p64
      %p66 = scmp.ne.s32.totalorder %s58, %s61
      %p67 = scmp.eq.s32.totalorder %s27, 0
      %p68 = por %p66, %p67
      %p69 = scmp.ne.s32.totalorder %s58, %s61
      %p70 = scmp.eq.s32.totalorder %s32, 1
      %p71 = por %p69, %p70
      %p72 = scmp.ne.s32.totalorder %s61, %s62
      %p73 = scmp.eq.s32.totalorder %s32, 0
      %p74 = por %p72, %p73
      %p75 = scmp.ne.s32.totalorder %s61, %s62
      %p76 = scmp.eq.s32.totalorder %s33, 1
      %p77 = por %p75, %p76
      %p79 = scmp.ne.s32.totalorder %s62, %s78
      %p80 = scmp.eq.s32.totalorder %s33, 0
      %p81 = por %p79, %p80
      %s82 = ssub.s32 %s34, %s53
      %s83 = ssub.s32 %s36, %s45
      %s84 = sor.u32 %s82, %s83
      %p85 = scmp.eq.s32.totalorder %s84, 0
      %s87 = sadd.s32 %s86, 1
      %s88 = scalar_select %p85, %s86, %s87
      %p91 = pneg %p85
      %p92 = scmp.eq.s32.totalorder %s27, 1
      %p93 = por %p91, %p92
      %p94 = scmp.ne.s32.totalorder %s86, %s89
      %p95 = scmp.eq.s32.totalorder %s27, 0
      %p96 = por %p94, %p95
      %p97 = scmp.ne.s32.totalorder %s86, %s89
      %p98 = scmp.eq.s32.totalorder %s32, 1
      %p99 = por %p97, %p98
      %p100 = scmp.ne.s32.totalorder %s89, %s90
      %p101 = scmp.eq.s32.totalorder %s32, 0
      %p102 = por %p100, %p101
      %p103 = scmp.ne.s32.totalorder %s89, %s90
      %p104 = scmp.eq.s32.totalorder %s33, 1
      %p105 = por %p103, %p104
      %p107 = scmp.ne.s32.totalorder %s90, %s106
      %p108 = scmp.eq.s32.totalorder %s33, 0
      %p109 = por %p107, %p108
      %s111 = sadd.s32 %s110, 1
      %p114 = scmp.eq.s32.totalorder %s27, 1
      %p115 = scmp.ne.s32.totalorder %s110, %s112
      %p116 = scmp.eq.s32.totalorder %s27, 0
      %p117 = por %p115, %p116
      %p118 = scmp.ne.s32.totalorder %s110, %s112
      %p119 = scmp.eq.s32.totalorder %s32, 1
      %p120 = por %p118, %p119
      %p121 = scmp.ne.s32.totalorder %s112, %s113
      %p122 = scmp.eq.s32.totalorder %s32, 0
      %p123 = por %p121, %p122
      %p124 = scmp.ne.s32.totalorder %s112, %s113
      %p125 = scmp.eq.s32.totalorder %s33, 1
      %p126 = por %p124, %p125
      %p128 = scmp.ne.s32.totalorder %s113, %s127
      %p129 = scmp.eq.s32.totalorder %s33, 0
      %p130 = por %p128, %p129
      %s132 = sadd.s32 %s131, 1
      %p135 = scmp.eq.s32.totalorder %s27, 1
      %p136 = scmp.ne.s32.totalorder %s131, %s133
      %p137 = scmp.eq.s32.totalorder %s27, 0
      %p138 = por %p136, %p137
      %p139 = scmp.ne.s32.totalorder %s131, %s133
      %p140 = scmp.eq.s32.totalorder %s32, 1
      %p141 = por %p139, %p140
      %p142 = scmp.ne.s32.totalorder %s133, %s134
      %p143 = scmp.eq.s32.totalorder %s32, 0
      %p144 = por %p142, %p143
      %p145 = scmp.ne.s32.totalorder %s133, %s134
      %p146 = scmp.eq.s32.totalorder %s33, 1
      %p147 = por %p145, %p146
      %p149 = scmp.ne.s32.totalorder %s134, %s148
      %p150 = scmp.eq.s32.totalorder %s33, 0
      %p151 = por %p149, %p150
      %s153 = sadd.s32 %s152, 1
      %p156 = scmp.eq.s32.totalorder %s27, 1
      %p157 = scmp.ne.s32.totalorder %s152, %s154
      %p158 = scmp.eq.s32.totalorder %s27, 0
      %p159 = por %p157, %p158
      %p160 = scmp.ne.s32.totalorder %s152, %s154
      %p161 = scmp.eq.s32.totalorder %s32, 1
      %p162 = por %p160, %p161
      %p163 = scmp.ne.s32.totalorder %s154, %s155
      %p164 = scmp.eq.s32.totalorder %s32, 0
      %p165 = por %p163, %p164
      %p166 = scmp.ne.s32.totalorder %s154, %s155
      %p167 = scmp.eq.s32.totalorder %s33, 1
      %p168 = por %p166, %p167
      %p170 = scmp.ne.s32.totalorder %s155, %s169
      %p171 = scmp.eq.s32.totalorder %s33, 0
      %p172 = por %p170, %p171
      %s174 = sadd.s32 %s173, 1
      %p177 = scmp.eq.s32.totalorder %s27, 1
      %p178 = scmp.ne.s32.totalorder %s173, %s175
      %p179 = scmp.eq.s32.totalorder %s27, 0
      %p180 = por %p178, %p179
      %p181 = scmp.ne.s32.totalorder %s173, %s175
      %p182 = scmp.eq.s32.totalorder %s32, 1
      %p183 = por %p181, %p182
      %p184 = scmp.ne.s32.totalorder %s175, %s176
      %p185 = scmp.eq.s32.totalorder %s32, 0
      %p186 = por %p184, %p185
      %p187 = scmp.ne.s32.totalorder %s175, %s176
      %p188 = scmp.eq.s32.totalorder %s33, 1
      %p189 = por %p187, %p188
      %p191 = scmp.ne.s32.totalorder %s176, %s190
      %p192 = scmp.eq.s32.totalorder %s33, 0
      %p193 = por %p191, %p192
      %s195 = sadd.s32 %s194, 1
      %p198 = scmp.eq.s32.totalorder %s27, 1
      %p199 = scmp.ne.s32.totalorder %s194, %s196
      %p200 = scmp.eq.s32.totalorder %s27, 0
      %p201 = por %p199, %p200
      %p202 = scmp.ne.s32.totalorder %s194, %s196
      %p203 = scmp.eq.s32.totalorder %s32, 1
      %p204 = por %p202, %p203
      %p205 = scmp.ne.s32.totalorder %s196, %s197
      %p206 = scmp.eq.s32.totalorder %s32, 0
      %p207 = por %p205, %p206
      %p208 = scmp.ne.s32.totalorder %s196, %s197
      %p209 = scmp.eq.s32.totalorder %s33, 1
      %p210 = por %p208, %p209
      %p212 = scmp.ne.s32.totalorder %s197, %s211
      %p213 = scmp.eq.s32.totalorder %s33, 0
      %p214 = por %p212, %p213
      %s216 = sadd.s32 %s215, 1
      %p219 = scmp.eq.s32.totalorder %s27, 1
      %p220 = scmp.ne.s32.totalorder %s215, %s217
      %p221 = scmp.eq.s32.totalorder %s27, 0
      %p222 = por %p220, %p221
      %p223 = scmp.ne.s32.totalorder %s215, %s217
      %p224 = scmp.eq.s32.totalorder %s32, 1
      %p225 = por %p223, %p224
      %p226 = scmp.ne.s32.totalorder %s217, %s218
      %p227 = scmp.eq.s32.totalorder %s32, 0
      %p228 = por %p226, %p227
      %p229 = scmp.ne.s32.totalorder %s217, %s218
      %p230 = scmp.eq.s32.totalorder %s33, 1
      %p231 = por %p229, %p230
      %p233 = scmp.ne.s32.totalorder %s218, %s232
      %p234 = scmp.eq.s32.totalorder %s33, 0
      %p235 = por %p233, %p234
      %s237 = sadd.s32 %s236, 1
      %p240 = scmp.eq.s32.totalorder %s27, 1
      %p241 = scmp.ne.s32.totalorder %s236, %s238
      %p242 = scmp.eq.s32.totalorder %s27, 0
      %p243 = por %p241, %p242
      %p244 = scmp.ne.s32.totalorder %s236, %s238
      %p245 = scmp.eq.s32.totalorder %s32, 1
      %p246 = por %p244, %p245
      %p247 = scmp.ne.s32.totalorder %s238, %s239
      %p248 = scmp.eq.s32.totalorder %s32, 0
      %p249 = por %p247, %p248
      %p250 = scmp.ne.s32.totalorder %s238, %s239
      %p251 = scmp.eq.s32.totalorder %s33, 1
      %p252 = por %p250, %p251
      %p254 = scmp.ne.s32.totalorder %s239, %s253
      %p255 = scmp.eq.s32.totalorder %s33, 0
      %p256 = por %p254, %p255
      %s258 = sadd.s32 %s257, 1
      %p261 = scmp.eq.s32.totalorder %s27, 1
      %p262 = scmp.ne.s32.totalorder %s257, %s259
      %p263 = scmp.eq.s32.totalorder %s27, 0
      %p264 = por %p262, %p263
      %p265 = scmp.ne.s32.totalorder %s257, %s259
      %p266 = scmp.eq.s32.totalorder %s32, 1
      %p267 = por %p265, %p266
      %p268 = scmp.ne.s32.totalorder %s259, %s260
      %p269 = scmp.eq.s32.totalorder %s32, 0
      %p270 = por %p268, %p269
      %p271 = scmp.ne.s32.totalorder %s259, %s260
      %p272 = scmp.eq.s32.totalorder %s33, 1
      %p273 = por %p271, %p272
      %p275 = scmp.ne.s32.totalorder %s260, %s274
      %p276 = scmp.eq.s32.totalorder %s33, 0
      %p277 = por %p275, %p276
      %s278 = ssub.s32 %s34, %s53
      %s279 = ssub.s32 %s35, %s49
      %s280 = sor.u32 %s278, %s279
      %p281 = scmp.eq.s32.totalorder %s280, 0
      %s283 = sadd.s32 %s282, 1
      %s284 = scalar_select %p281, %s282, %s283
      %p287 = pneg %p281
      %p288 = scmp.eq.s32.totalorder %s27, 1
      %p289 = por %p287, %p288
      %p290 = scmp.ne.s32.totalorder %s282, %s285
      %p291 = scmp.eq.s32.totalorder %s27, 0
      %p292 = por %p290, %p291
      %p293 = scmp.ne.s32.totalorder %s282, %s285
      %p294 = scmp.eq.s32.totalorder %s32, 1
      %p295 = por %p293, %p294
      %p296 = scmp.ne.s32.totalorder %s285, %s286
      %p297 = scmp.eq.s32.totalorder %s32, 0
      %p298 = por %p296, %p297
      %p299 = scmp.ne.s32.totalorder %s285, %s286
      %p300 = scmp.eq.s32.totalorder %s33, 1
      %p301 = por %p299, %p300
      %p303 = scmp.ne.s32.totalorder %s286, %s302
      %p304 = scmp.eq.s32.totalorder %s33, 0
      %p305 = por %p303, %p304
      %p306 = scmp.le.s32.totalorder 1, %s27
      %p307 = scmp.lt.s32.totalorder %s27, 3
      %p308 = pnand %p306, %p307
      %p309 = pneg %p308
      // Predicated region
      $region9: #{tpu_custom_call.1} parent=5 // pred_check
        _
      $region10: #{tpu_custom_call.1} parent=5 // pred_check_branch
        %311 = sbr.rel (%p308) target = $region12
      $region11: #{tpu_custom_call.1} parent=5 // pred_region
        %s312 = ssub.s32 %s27, 1
        // Predicated region
        $region13: #{tpu_custom_call.1} parent=11 // pred_check
          %p313 = pneg %p123
        $region14: #{tpu_custom_call.1} parent=11 // pred_check_branch
          %315 = sbr.rel (%p313) target = $region16
        $region15: #{tpu_custom_call.1} parent=11 // pred_region
          %s317 = ssub.s32 1024, 1024
          %318 = vsyncadd [#allocation12], %s317
          %s319 = sshll.u32 [#allocation13], 4
          %s320 = int_to_ptr.vmem [resolvable:$true] %s319
          %325 = dma.hbm_to_vmem [thread:$0]  %s2, 1024, %s320, [#allocation12], 256, 256, 16
        $region16: #{tpu_custom_call.1} parent=11 // pred_fallthru
          _
        // Predicated region
        $region17: #{tpu_custom_call.1} parent=11 // pred_check
          %p326 = pneg %p144
        $region18: #{tpu_custom_call.1} parent=11 // pred_check_branch
          %328 = sbr.rel (%p326) target = $region20
        $region19: #{tpu_custom_call.1} parent=11 // pred_region
          _
        $region20: #{tpu_custom_call.1} parent=11 // pred_fallthru
          _
        // Predicated region
        $region21: #{tpu_custom_call.1} parent=11 // pred_check
          %p329 = pneg %p165
        $region22: #{tpu_custom_call.1} parent=11 // pred_check_branch
          %331 = sbr.rel (%p329) target = $region24
        $region23: #{tpu_custom_call.1} parent=11 // pred_region
          %s333 = ssub.s32 1024, 1024
          %334 = vsyncadd [#allocation15], %s333
          %s335 = sshll.u32 [#allocation14], 4
          %s336 = int_to_ptr.vmem [resolvable:$true] %s335
          %341 = dma.hbm_to_vmem [thread:$0]  %s4, 1024, %s336, [#allocation15], 256, 256, 16
        $region24: #{tpu_custom_call.1} parent=11 // pred_fallthru
          _
        // Predicated region
        $region25: #{tpu_custom_call.1} parent=11 // pred_check
          %p342 = pneg %p186
        $region26: #{tpu_custom_call.1} parent=11 // pred_check_branch
          %344 = sbr.rel (%p342) target = $region28
        $region27: #{tpu_custom_call.1} parent=11 // pred_region
          _
        $region28: #{tpu_custom_call.1} parent=11 // pred_fallthru
          _
        // Predicated region
        $region29: #{tpu_custom_call.1} parent=11 // pred_check
          %p345 = pneg %p207
        $region30: #{tpu_custom_call.1} parent=11 // pred_check_branch
          %347 = sbr.rel (%p345) target = $region32
        $region31: #{tpu_custom_call.1} parent=11 // pred_region
          %s349 = ssub.s32 1024, 1024
          %350 = vsyncadd [#allocation15], %s349
          %s351 = sshll.u32 [#allocation16], 4
          %s352 = int_to_ptr.vmem [resolvable:$true] %s351
          %357 = dma.hbm_to_vmem [thread:$0]  %s6, 1024, %s352, [#allocation15], 256, 256, 16
        $region32: #{tpu_custom_call.1} parent=11 // pred_fallthru
          _
        // Predicated region
        $region33: #{tpu_custom_call.1} parent=11 // pred_check
          %p358 = pneg %p228
        $region34: #{tpu_custom_call.1} parent=11 // pred_check_branch
          %360 = sbr.rel (%p358) target = $region36
        $region35: #{tpu_custom_call.1} parent=11 // pred_region
          _
        $region36: #{tpu_custom_call.1} parent=11 // pred_fallthru
          _
        // Predicated region
        $region37: #{tpu_custom_call.1} parent=11 // pred_check
          %p361 = pneg %p249
        $region38: #{tpu_custom_call.1} parent=11 // pred_check_branch
          %363 = sbr.rel (%p361) target = $region40
        $region39: #{tpu_custom_call.1} parent=11 // pred_region
          %s365 = ssub.s32 4096, 4096
          %366 = vsyncadd [#allocation18], %s365
          %s367 = sshll.u32 [#allocation17], 4
          %s368 = int_to_ptr.vmem [resolvable:$true] %s367
          %373 = dma.hbm_to_vmem [thread:$0]  %s8, 4096, %s368, [#allocation18], 64, 64, 4
        $region40: #{tpu_custom_call.1} parent=11 // pred_fallthru
          _
        // Predicated region
        $region41: #{tpu_custom_call.1} parent=11 // pred_check
          %p374 = pneg %p270
        $region42: #{tpu_custom_call.1} parent=11 // pred_check_branch
          %376 = sbr.rel (%p374) target = $region44
        $region43: #{tpu_custom_call.1} parent=11 // pred_region
          _
        $region44: #{tpu_custom_call.1} parent=11 // pred_fallthru
          _
      $region12: #{tpu_custom_call.1} parent=5 // pred_fallthru
        _
      %p377 = scmp.lt.s32.totalorder %s27, 2
      // Predicated region
      $region45: #{tpu_custom_call.1} parent=5 // pred_check
        %p378 = pneg %p377
      $region46: #{tpu_custom_call.1} parent=5 // pred_check_branch
        %380 = sbr.rel (%p378) target = $region48
      $region47: #{tpu_custom_call.1} parent=5 // pred_region
        // Predicated region
        $region49: #{tpu_custom_call.1} parent=47 // pred_check
          %p381 = pneg %p68
        $region50: #{tpu_custom_call.1} parent=47 // pred_check_branch
          %383 = sbr.rel (%p381) target = $region52
        $region51: #{tpu_custom_call.1} parent=47 // pred_region
          %s384 = sand.u32 %s58, 1
          %s385 = scalar_lea.sflag [#allocation9], %s384
          %s386 = sand.u32 %s58, 1
          %s387 = smul.addr %s386, 8
          %s388 = scalar_lea.vmem [#allocation8], %s387
          %s390 = ssub.s32 128, 128
          %391 = vsyncadd %s385, %s390
          %s392 = sadd.s32 %s35, %s34
          %s393 = smul.addr %s392, 128
          %s394 = scalar_lea.hbm %s0, %s393
          %s396 = sshll.u32 %s388, 4
          %s397 = int_to_ptr.vmem [resolvable:$true] %s396
          %399 = dma.hbm_to_vmem [thread:$0]  %s394, 128, %s397, %s385
        $region52: #{tpu_custom_call.1} parent=47 // pred_fallthru
          _
        // Predicated region
        $region53: #{tpu_custom_call.1} parent=47 // pred_check
          %p400 = pneg %p96
        $region54: #{tpu_custom_call.1} parent=47 // pred_check_branch
          %402 = sbr.rel (%p400) target = $region56
        $region55: #{tpu_custom_call.1} parent=47 // pred_region
          %s403 = sand.u32 %s27, 1
          %s404 = scalar_lea.sflag [#allocation12], %s403
          %s405 = sand.u32 %s86, 1
          %s406 = smul.addr %s405, 8
          %s407 = scalar_lea.vmem [#allocation11], %s406
          %s409 = ssub.s32 128, 128
          %410 = vsyncadd %s404, %s409
          %s411 = sadd.s32 %s36, %s34
          %s412 = smul.addr %s411, 128
          %s413 = scalar_lea.hbm %s1, %s412
          %s415 = sshll.u32 %s407, 4
          %s416 = int_to_ptr.vmem [resolvable:$true] %s415
          %418 = dma.hbm_to_vmem [thread:$0]  %s413, 128, %s416, %s404
        $region56: #{tpu_custom_call.1} parent=47 // pred_fallthru
          _
      $region48: #{tpu_custom_call.1} parent=5 // pred_fallthru
        _
      %p419 = scmp.le.s32.totalorder 1, %s27
      %p420 = scmp.lt.s32.totalorder %s27, 3
      %p421 = pnand %p419, %p420
      %p422 = pneg %p421
      // Predicated region
      $region57: #{tpu_custom_call.1} parent=5 // pred_check
        _
      $region58: #{tpu_custom_call.1} parent=5 // pred_check_branch
        %424 = sbr.rel (%p421) target = $region60
      $region59: #{tpu_custom_call.1} parent=5 // pred_region
        %s425 = ssub.s32 %s27, 1
        %s426 = sand.u32 %s61, 1
        %s427 = scalar_lea.sflag [#allocation9], %s426
        %s428 = sand.u32 %s61, 1
        %s429 = smul.addr %s428, 8
        %s430 = scalar_lea.vmem [#allocation8], %s429
        // Predicated region
        $region61: #{tpu_custom_call.1} parent=59 // pred_check
          %p431 = pneg %p74
        $region62: #{tpu_custom_call.1} parent=59 // pred_check_branch
          %433 = sbr.rel (%p431) target = $region64
        $region63: #{tpu_custom_call.1} parent=59 // pred_region
          %434 = dma.done %s427, 128
        $region64: #{tpu_custom_call.1} parent=59 // pred_fallthru
          _
        %s435 = sand.u32 %s32, 1
        %s436 = scalar_lea.sflag [#allocation12], %s435
        %s437 = sand.u32 %s89, 1
        %s438 = smul.addr %s437, 8
        %s439 = scalar_lea.vmem [#allocation11], %s438
        // Predicated region
        $region65: #{tpu_custom_call.1} parent=59 // pred_check
          %p440 = pneg %p102
        $region66: #{tpu_custom_call.1} parent=59 // pred_check_branch
          %442 = sbr.rel (%p440) target = $region68
        $region67: #{tpu_custom_call.1} parent=59 // pred_region
          %443 = dma.done %s436, 128
        $region68: #{tpu_custom_call.1} parent=59 // pred_fallthru
          _
        // Predicated region
        $region69: #{tpu_custom_call.1} parent=59 // pred_check
          %p444 = pneg %p123
        $region70: #{tpu_custom_call.1} parent=59 // pred_check_branch
          %446 = sbr.rel (%p444) target = $region72
        $region71: #{tpu_custom_call.1} parent=59 // pred_region
          %447 = dma.done [#allocation12], 1024
        $region72: #{tpu_custom_call.1} parent=59 // pred_fallthru
          _
        // Predicated region
        $region73: #{tpu_custom_call.1} parent=59 // pred_check
          %p448 = pneg %p165
        $region74: #{tpu_custom_call.1} parent=59 // pred_check_branch
          %450 = sbr.rel (%p448) target = $region76
        $region75: #{tpu_custom_call.1} parent=59 // pred_region
          %451 = dma.done [#allocation15], 1024
        $region76: #{tpu_custom_call.1} parent=59 // pred_fallthru
          _
        // Predicated region
        $region77: #{tpu_custom_call.1} parent=59 // pred_check
          %p452 = pneg %p207
        $region78: #{tpu_custom_call.1} parent=59 // pred_check_branch
          %454 = sbr.rel (%p452) target = $region80
        $region79: #{tpu_custom_call.1} parent=59 // pred_region
          %455 = dma.done [#allocation15], 1024
        $region80: #{tpu_custom_call.1} parent=59 // pred_fallthru
          _
        // Predicated region
        $region81: #{tpu_custom_call.1} parent=59 // pred_check
          %p456 = pneg %p249
        $region82: #{tpu_custom_call.1} parent=59 // pred_check_branch
          %458 = sbr.rel (%p456) target = $region84
        $region83: #{tpu_custom_call.1} parent=59 // pred_region
          %459 = dma.done [#allocation18], 4096
        $region84: #{tpu_custom_call.1} parent=59 // pred_fallthru
          _
        %s460 = sand.u32 %s61, 1
        %s461 = scalar_lea.sflag [#allocation9], %s460
        %s462 = sand.u32 %s61, 1
        %s463 = smul.addr %s462, 8
        %s464 = scalar_lea.vmem [#allocation8], %s463
        %p465 = pneg %p74
        %p466 = pneg %p71
        %s467 = sand.u32 %s32, 1
        %s468 = scalar_lea.sflag [#allocation12], %s467
        %s469 = sand.u32 %s89, 1
        %s470 = smul.addr %s469, 8
        %s471 = scalar_lea.vmem [#allocation11], %s470
        %p472 = pneg %p102
        %p473 = pneg %p99
        %p474 = pneg %p123
        %p475 = pneg %p120
        %p476 = pneg %p144
        %p477 = pneg %p141
        %p478 = pneg %p165
        %p479 = pneg %p162
        %p480 = pneg %p186
        %p481 = pneg %p183
        %p482 = pneg %p207
        %p483 = pneg %p204
        %p484 = pneg %p228
        %p485 = pneg %p225
        %p486 = pneg %p249
        %p487 = pneg %p246
        %p488 = pneg %p270
        %p489 = pneg %p267
        %p490 = pneg %p298
        %p491 = pneg %p295
        %s492 = sand.u32 %s285, 1
        %s493 = scalar_lea.sflag [#allocation10], %s492
        %s494 = sand.u32 %s285, 1
        %s495 = smul.addr %s494, 8
        %s496 = scalar_lea.vmem [#allocation19], %s495
        %p498 = scmp.eq.s32.totalorder %s38, 0
        // Predicated region
        $region85: #{tpu_custom_call.1} parent=59 // pred_check
          %p499 = pneg %p498
        $region86: #{tpu_custom_call.1} parent=59 // pred_check_branch
          %501 = sbr.rel (%p499) target = $region88
        $region87: #{tpu_custom_call.1} parent=59 // pred_region
          %v502 = vld [vmem:[%s439] sm:$0xff]
          %v503 = vpack.c.bf16 %v502, %v502
          %v504 = vld [vmem:[#allocation14] sm:$0xff]
          %v505 = vld [vmem:[#allocation14 + $0x8] sm:$0xff]
          %v506 = vld [vmem:[#allocation14 + $0x10] sm:$0xff]
          %v507 = vld [vmem:[#allocation14 + $0x18] sm:$0xff]
          %v508 = vld [vmem:[#allocation14 + $0x20] sm:$0xff]
          %v509 = vld [vmem:[#allocation14 + $0x28] sm:$0xff]
          %v510 = vld [vmem:[#allocation14 + $0x30] sm:$0xff]
          %v511 = vld [vmem:[#allocation14 + $0x38] sm:$0xff]
          %v512 = vld [vmem:[%s5] sm:$0xf]
          %v514 = vlaneseq
          %v515 = vshrl.u32 %v514, 7
          %v516 = vsub.s32 0, %v515
          %v517 = vrot.slane %v512, %v516
          %v518 = vlaneseq
          %v519 = vshrl.u32 %v518, 7
          %v520 = vsub.s32 1, %v519
          %v521 = vrot.slane %v512, %v520
          %v522 = vlaneseq
          %v523 = vshrl.u32 %v522, 7
          %v524 = vsub.s32 2, %v523
          %v525 = vrot.slane %v512, %v524
          %v526 = vlaneseq
          %v527 = vshrl.u32 %v526, 7
          %v528 = vsub.s32 3, %v527
          %v529 = vrot.slane %v512, %v528
          %v542 = vunpack.c.l.b16 %v504
          %v543 = vunpack.c.h.b16 %v504
          %v544 = vunpack.c.l.b16 %v505
          %v545 = vunpack.c.h.b16 %v505
          %v546 = vunpack.c.l.b16 %v506
          %v547 = vunpack.c.h.b16 %v506
          %v548 = vunpack.c.l.b16 %v507
          %v549 = vunpack.c.h.b16 %v507
          %v550 = vunpack.c.l.b16 %v508
          %v551 = vunpack.c.h.b16 %v508
          %v552 = vunpack.c.l.b16 %v509
          %v553 = vunpack.c.h.b16 %v509
          %v554 = vunpack.c.l.b16 %v510
          %v555 = vunpack.c.h.b16 %v510
          %v556 = vunpack.c.l.b16 %v511
          %v557 = vunpack.c.h.b16 %v511
          %v558 = vpack.c.b16 %v546, %v542
          %v559 = vpack.c.b16 %v547, %v543
          %v560 = vpack.c.b16 %v548, %v544
          %v561 = vpack.c.b16 %v549, %v545
          %v562 = vpack.c.b16 %v554, %v550
          %v563 = vpack.c.b16 %v555, %v551
          %v564 = vpack.c.b16 %v556, %v552
          %v565 = vpack.c.b16 %v557, %v553
          %vm574 = vcmask 261120
          %v576 = vsel %vm574, %v503, 0
          %578 = vmatprep.subr.bf16.mxu0 %v559
          %579 = vmatpush1.bf16.msra.mxu0 %v558
          %580 = vmatprep.subr.bf16.mxu0 %v563
          %581 = vmatpush1.bf16.msra.mxu0 %v562
          %582 = vmatprep.subr.bf16.mxu0 0
          %583 = vmatpush1.bf16.msra.mxu0 0
          %584 = vmatprep.subr.bf16.mxu0 0
          %585 = vmatpush1.bf16.msra.mxu0 0
          %586 = vmatprep.subr.bf16.mxu0 0
          %587 = vmatpush1.bf16.msra.mxu0 0
          %588 = vmatprep.subr.bf16.mxu0 0
          %589 = vmatpush1.bf16.msra.mxu0 0
          %590 = vmatprep.subr.bf16.mxu0 0
          %591 = vmatpush1.bf16.msra.mxu0 0
          %592 = vmatprep.subr.bf16.mxu0 0
          %593 = vmatpush1.bf16.msra.mxu0 0
          %594 = vmatprep.subr.bf16.mxu0 0
          %595 = vmatpush1.bf16.msra.mxu0 0
          %596 = vmatprep.subr.bf16.mxu0 0
          %597 = vmatpush1.bf16.msra.mxu0 0
          %598 = vmatprep.subr.bf16.mxu0 0
          %599 = vmatpush1.bf16.msra.mxu0 0
          %600 = vmatprep.subr.bf16.mxu0 0
          %601 = vmatpush1.bf16.msra.mxu0 0
          %602 = vmatprep.subr.bf16.mxu0 0
          %603 = vmatpush1.bf16.msra.mxu0 0
          %604 = vmatprep.subr.bf16.mxu0 0
          %605 = vmatpush1.bf16.msra.mxu0 0
          %606 = vmatprep.subr.bf16.mxu0 0
          %607 = vmatpush1.bf16.msra.mxu0 0
          %608 = vmatprep.subr.bf16.mxu0 0
          %609 = vmatpush1.bf16.msra.mxu0 0
          %610 = vmatprep.mubr.bf16.mxu0 0
          %611 = vmatmul.mubr.bf16.gmra.mrb[0].mxu0 %v576
          %v612 = vpop.f32.mrb[0].mxu0
          %v613 = vadd.f32 %v517, %v612
          %v614 = vpop.f32.mrb[0].mxu0
          %v615 = vadd.f32 %v521, %v614
          %v616 = vpop.f32.mrb[0].mxu0
          %v617 = vpop.f32.mrb[0].mxu0
          %618 = vdwg.mxu0
          %619 = vmatprep.subr.bf16.mxu0 %v561
          %620 = vmatpush1.bf16.msra.mxu0 %v560
          %621 = vmatprep.subr.bf16.mxu0 %v565
          %622 = vmatpush1.bf16.msra.mxu0 %v564
          %623 = vmatprep.subr.bf16.mxu0 0
          %624 = vmatpush1.bf16.msra.mxu0 0
          %625 = vmatprep.subr.bf16.mxu0 0
          %626 = vmatpush1.bf16.msra.mxu0 0
          %627 = vmatprep.subr.bf16.mxu0 0
          %628 = vmatpush1.bf16.msra.mxu0 0
          %629 = vmatprep.subr.bf16.mxu0 0
          %630 = vmatpush1.bf16.msra.mxu0 0
          %631 = vmatprep.subr.bf16.mxu0 0
          %632 = vmatpush1.bf16.msra.mxu0 0
          %633 = vmatprep.subr.bf16.mxu0 0
          %634 = vmatpush1.bf16.msra.mxu0 0
          %635 = vmatprep.subr.bf16.mxu0 0
          %636 = vmatpush1.bf16.msra.mxu0 0
          %637 = vmatprep.subr.bf16.mxu0 0
          %638 = vmatpush1.bf16.msra.mxu0 0
          %639 = vmatprep.subr.bf16.mxu0 0
          %640 = vmatpush1.bf16.msra.mxu0 0
          %641 = vmatprep.subr.bf16.mxu0 0
          %642 = vmatpush1.bf16.msra.mxu0 0
          %643 = vmatprep.subr.bf16.mxu0 0
          %644 = vmatpush1.bf16.msra.mxu0 0
          %645 = vmatprep.subr.bf16.mxu0 0
          %646 = vmatpush1.bf16.msra.mxu0 0
          %647 = vmatprep.subr.bf16.mxu0 0
          %648 = vmatpush1.bf16.msra.mxu0 0
          %649 = vmatprep.subr.bf16.mxu0 0
          %650 = vmatpush1.bf16.msra.mxu0 0
          %651 = vmatprep.mubr.bf16.mxu0 0
          %652 = vmatmul.mubr.bf16.gmra.mrb[0].mxu0 %v576
          %v653 = vpop.f32.mrb[0].mxu0
          %v654 = vadd.f32 %v525, %v653
          %v655 = vpop.f32.mrb[0].mxu0
          %v656 = vadd.f32 %v529, %v655
          %v657 = vpop.f32.mrb[0].mxu0
          %v658 = vpop.f32.mrb[0].mxu0
          %659 = vdwg.mxu0
          %v660 = vld [vmem:[#allocation16] sm:$0xff]
          %v661 = vld [vmem:[#allocation16 + $0x8] sm:$0xff]
          %v662 = vld [vmem:[#allocation16 + $0x10] sm:$0xff]
          %v663 = vld [vmem:[#allocation16 + $0x18] sm:$0xff]
          %v664 = vld [vmem:[#allocation16 + $0x20] sm:$0xff]
          %v665 = vld [vmem:[#allocation16 + $0x28] sm:$0xff]
          %v666 = vld [vmem:[#allocation16 + $0x30] sm:$0xff]
          %v667 = vld [vmem:[#allocation16 + $0x38] sm:$0xff]
          %v668 = vld [vmem:[%s7] sm:$0xf]
          %v670 = vlaneseq
          %v671 = vshrl.u32 %v670, 7
          %v672 = vsub.s32 0, %v671
          %v673 = vrot.slane %v668, %v672
          %v674 = vlaneseq
          %v675 = vshrl.u32 %v674, 7
          %v676 = vsub.s32 1, %v675
          %v677 = vrot.slane %v668, %v676
          %v678 = vlaneseq
          %v679 = vshrl.u32 %v678, 7
          %v680 = vsub.s32 2, %v679
          %v681 = vrot.slane %v668, %v680
          %v682 = vlaneseq
          %v683 = vshrl.u32 %v682, 7
          %v684 = vsub.s32 3, %v683
          %v685 = vrot.slane %v668, %v684
          %v698 = vunpack.c.l.b16 %v660
          %v699 = vunpack.c.h.b16 %v660
          %v700 = vunpack.c.l.b16 %v661
          %v701 = vunpack.c.h.b16 %v661
          %v702 = vunpack.c.l.b16 %v662
          %v703 = vunpack.c.h.b16 %v662
          %v704 = vunpack.c.l.b16 %v663
          %v705 = vunpack.c.h.b16 %v663
          %v706 = vunpack.c.l.b16 %v664
          %v707 = vunpack.c.h.b16 %v664
          %v708 = vunpack.c.l.b16 %v665
          %v709 = vunpack.c.h.b16 %v665
          %v710 = vunpack.c.l.b16 %v666
          %v711 = vunpack.c.h.b16 %v666
          %v712 = vunpack.c.l.b16 %v667
          %v713 = vunpack.c.h.b16 %v667
          %v714 = vpack.c.b16 %v702, %v698
          %v715 = vpack.c.b16 %v703, %v699
          %v716 = vpack.c.b16 %v704, %v700
          %v717 = vpack.c.b16 %v705, %v701
          %v718 = vpack.c.b16 %v710, %v706
          %v719 = vpack.c.b16 %v711, %v707
          %v720 = vpack.c.b16 %v712, %v708
          %v721 = vpack.c.b16 %v713, %v709
          %730 = vmatprep.subr.bf16.mxu0 %v715
          %731 = vmatpush1.bf16.msra.mxu0 %v714
          %732 = vmatprep.subr.bf16.mxu0 %v719
          %733 = vmatpush1.bf16.msra.mxu0 %v718
          %734 = vmatprep.subr.bf16.mxu0 0
          %735 = vmatpush1.bf16.msra.mxu0 0
          %736 = vmatprep.subr.bf16.mxu0 0
          %737 = vmatpush1.bf16.msra.mxu0 0
          %738 = vmatprep.subr.bf16.mxu0 0
          %739 = vmatpush1.bf16.msra.mxu0 0
          %740 = vmatprep.subr.bf16.mxu0 0
          %741 = vmatpush1.bf16.msra.mxu0 0
          %742 = vmatprep.subr.bf16.mxu0 0
          %743 = vmatpush1.bf16.msra.mxu0 0
          %744 = vmatprep.subr.bf16.mxu0 0
          %745 = vmatpush1.bf16.msra.mxu0 0
          %746 = vmatprep.subr.bf16.mxu0 0
          %747 = vmatpush1.bf16.msra.mxu0 0
          %748 = vmatprep.subr.bf16.mxu0 0
          %749 = vmatpush1.bf16.msra.mxu0 0
          %750 = vmatprep.subr.bf16.mxu0 0
          %751 = vmatpush1.bf16.msra.mxu0 0
          %752 = vmatprep.subr.bf16.mxu0 0
          %753 = vmatpush1.bf16.msra.mxu0 0
          %754 = vmatprep.subr.bf16.mxu0 0
          %755 = vmatpush1.bf16.msra.mxu0 0
          %756 = vmatprep.subr.bf16.mxu0 0
          %757 = vmatpush1.bf16.msra.mxu0 0
          %758 = vmatprep.subr.bf16.mxu0 0
          %759 = vmatpush1.bf16.msra.mxu0 0
          %760 = vmatprep.subr.bf16.mxu0 0
          %761 = vmatpush1.bf16.msra.mxu0 0
          %762 = vmatprep.mubr.bf16.mxu0 0
          %763 = vmatmul.mubr.bf16.gmra.mrb[0].mxu0 %v576
          %v764 = vpop.f32.mrb[0].mxu0
          %v765 = vadd.f32 %v673, %v764
          %v766 = vpop.f32.mrb[0].mxu0
          %v767 = vadd.f32 %v677, %v766
          %v768 = vpop.f32.mrb[0].mxu0
          %v769 = vpop.f32.mrb[0].mxu0
          %770 = vdwg.mxu0
          %771 = vmatprep.subr.bf16.mxu0 %v717
          %772 = vmatpush1.bf16.msra.mxu0 %v716
          %773 = vmatprep.subr.bf16.mxu0 %v721
          %774 = vmatpush1.bf16.msra.mxu0 %v720
          %775 = vmatprep.subr.bf16.mxu0 0
          %776 = vmatpush1.bf16.msra.mxu0 0
          %777 = vmatprep.subr.bf16.mxu0 0
          %778 = vmatpush1.bf16.msra.mxu0 0
          %779 = vmatprep.subr.bf16.mxu0 0
          %780 = vmatpush1.bf16.msra.mxu0 0
          %781 = vmatprep.subr.bf16.mxu0 0
          %782 = vmatpush1.bf16.msra.mxu0 0
          %783 = vmatprep.subr.bf16.mxu0 0
          %784 = vmatpush1.bf16.msra.mxu0 0
          %785 = vmatprep.subr.bf16.mxu0 0
          %786 = vmatpush1.bf16.msra.mxu0 0
          %787 = vmatprep.subr.bf16.mxu0 0
          %788 = vmatpush1.bf16.msra.mxu0 0
          %789 = vmatprep.subr.bf16.mxu0 0
          %790 = vmatpush1.bf16.msra.mxu0 0
          %791 = vmatprep.subr.bf16.mxu0 0
          %792 = vmatpush1.bf16.msra.mxu0 0
          %793 = vmatprep.subr.bf16.mxu0 0
          %794 = vmatpush1.bf16.msra.mxu0 0
          %795 = vmatprep.subr.bf16.mxu0 0
          %796 = vmatpush1.bf16.msra.mxu0 0
          %797 = vmatprep.subr.bf16.mxu0 0
          %798 = vmatpush1.bf16.msra.mxu0 0
          %799 = vmatprep.subr.bf16.mxu0 0
          %800 = vmatpush1.bf16.msra.mxu0 0
          %801 = vmatprep.subr.bf16.mxu0 0
          %802 = vmatpush1.bf16.msra.mxu0 0
          %803 = vmatprep.mubr.bf16.mxu0 0
          %804 = vmatmul.mubr.bf16.gmra.mrb[0].mxu0 %v576
          %v805 = vpop.f32.mrb[0].mxu0
          %v806 = vadd.f32 %v681, %v805
          %v807 = vpop.f32.mrb[0].mxu0
          %v808 = vadd.f32 %v685, %v807
          %v809 = vpop.f32.mrb[0].mxu0
          %v810 = vpop.f32.mrb[0].mxu0
          %811 = vdwg.mxu0
          %v812 = vpack.c.bf16 %v613, %v613
          %v814 = vunpack.c.l.s4 1983009808
          %v815 = vunpack.c.0.s8 %v814
          %v816 = vlaneseq
          %v817 = vshrl.u32 %v816, 7
          %v818 = vsub.s32 %v815, %v817
          %v819 = vrot.slane %v812, %v818
          %v820 = vpack.c.bf16 %v654, %v654
          %v822 = vunpack.c.l.s4 1983009808
          %v823 = vunpack.c.0.s8 %v822
          %v824 = vlaneseq
          %v825 = vshrl.u32 %v824, 7
          %v826 = vsub.s32 %v823, %v825
          %v827 = vrot.slane %v820, %v826
          %v828 = vcombine.low %v819, %v827
          %v829 = vcombine.high %v819, %v827
          %v831 = vunpack.c.l.s4 1934713408
          %v832 = vunpack.c.0.s8 %v831
          %v833 = vlaneseq
          %v834 = vshrl.u32 %v833, 7
          %v835 = vsub.s32 %v832, %v834
          %v836 = vrot.slane %v828, %v835
          %v838 = vunpack.c.l.s4 1934713408
          %v839 = vunpack.c.0.s8 %v838
          %v840 = vlaneseq
          %v841 = vshrl.u32 %v840, 7
          %v842 = vsub.s32 %v839, %v841
          %v843 = vrot.slane %v829, %v842
          %v844 = vcombine.high %v836, 0
          %v845 = vcombine.high %v843, 0
          %v846 = vpack.c.bf16 %v615, %v615
          %v848 = vunpack.c.l.s4 1983009808
          %v849 = vunpack.c.0.s8 %v848
          %v850 = vlaneseq
          %v851 = vshrl.u32 %v850, 7
          %v852 = vsub.s32 %v849, %v851
          %v853 = vrot.slane %v846, %v852
          %v854 = vpack.c.bf16 %v656, %v656
          %v856 = vunpack.c.l.s4 1983009808
          %v857 = vunpack.c.0.s8 %v856
          %v858 = vlaneseq
          %v859 = vshrl.u32 %v858, 7
          %v860 = vsub.s32 %v857, %v859
          %v861 = vrot.slane %v854, %v860
          %v862 = vcombine.low %v853, %v861
          %v863 = vcombine.high %v853, %v861
          %v865 = vunpack.c.l.s4 1934713408
          %v866 = vunpack.c.0.s8 %v865
          %v867 = vlaneseq
          %v868 = vshrl.u32 %v867, 7
          %v869 = vsub.s32 %v866, %v868
          %v870 = vrot.slane %v862, %v869
          %v872 = vunpack.c.l.s4 1934713408
          %v873 = vunpack.c.0.s8 %v872
          %v874 = vlaneseq
          %v875 = vshrl.u32 %v874, 7
          %v876 = vsub.s32 %v873, %v875
          %v877 = vrot.slane %v863, %v876
          %v878 = vcombine.high %v870, 0
          %v879 = vcombine.high %v877, 0
          %v882 = vpack.i.b16 %v870, %v836
          %v884 = vshrl.u32 %v836, 16
          %v885 = vshrl.u32 %v870, 16
          %v886 = vpack.i.b16 %v885, %v884
          %v890 = vpack.i.b16 %v878, %v844
          %v892 = vshrl.u32 %v844, 16
          %v893 = vshrl.u32 %v878, 16
          %v894 = vpack.i.b16 %v893, %v892
          %v898 = vpack.i.b16 %v877, %v843
          %v900 = vshrl.u32 %v843, 16
          %v901 = vshrl.u32 %v877, 16
          %v902 = vpack.i.b16 %v901, %v900
          %v906 = vpack.i.b16 %v879, %v845
          %v908 = vshrl.u32 %v845, 16
          %v909 = vshrl.u32 %v879, 16
          %v910 = vpack.i.b16 %v909, %v908
          %v912 = vcombine.low %v882, %v898
          %v914 = vunpack.c.l.s4 1983009808
          %v915 = vunpack.c.0.s8 %v914
          %v916 = vlaneseq
          %v917 = vshrl.u32 %v916, 7
          %v918 = vsub.s32 %v915, %v917
          %v919 = vrot.slane %v912, %v918
          %v920 = vcombine.low %v890, %v906
          %v922 = vunpack.c.l.s4 1983009808
          %v923 = vunpack.c.0.s8 %v922
          %v924 = vlaneseq
          %v925 = vshrl.u32 %v924, 7
          %v926 = vsub.s32 %v923, %v925
          %v927 = vrot.slane %v920, %v926
          %v928 = vcombine.low %v919, %v927
          %v930 = vunpack.c.l.s4 1934713408
          %v931 = vunpack.c.0.s8 %v930
          %v932 = vlaneseq
          %v933 = vshrl.u32 %v932, 7
          %v934 = vsub.s32 %v931, %v933
          %v935 = vrot.slane %v928, %v934
          %v936 = vcombine.high %v935, 0
          %v937 = vcombine.low %v886, %v902
          %v939 = vunpack.c.l.s4 1983009808
          %v940 = vunpack.c.0.s8 %v939
          %v941 = vlaneseq
          %v942 = vshrl.u32 %v941, 7
          %v943 = vsub.s32 %v940, %v942
          %v944 = vrot.slane %v937, %v943
          %v945 = vcombine.low %v894, %v910
          %v947 = vunpack.c.l.s4 1983009808
          %v948 = vunpack.c.0.s8 %v947
          %v949 = vlaneseq
          %v950 = vshrl.u32 %v949, 7
          %v951 = vsub.s32 %v948, %v950
          %v952 = vrot.slane %v945, %v951
          %v953 = vcombine.low %v944, %v952
          %v955 = vunpack.c.l.s4 1934713408
          %v956 = vunpack.c.0.s8 %v955
          %v957 = vlaneseq
          %v958 = vshrl.u32 %v957, 7
          %v959 = vsub.s32 %v956, %v958
          %v960 = vrot.slane %v953, %v959
          %v961 = vcombine.high %v960, 0
          %v964 = vpack.i.b16 %v960, %v935
          %v966 = vshrl.u32 %v935, 16
          %v967 = vshrl.u32 %v960, 16
          %v968 = vpack.i.b16 %v967, %v966
          %v972 = vpack.i.b16 %v961, %v936
          %v974 = vshrl.u32 %v936, 16
          %v975 = vshrl.u32 %v961, 16
          %v976 = vpack.i.b16 %v975, %v974
          %s978 = smul.u32 %s39, 4
          %s979 = smul.addr %s978, 4
          %s980 = scalar_lea.vmem [#allocation3], %s979
          %981 = vst [vmem:[%s980] sm:$0xf] %v964
          %982 = vst [vmem:[%s980 + $0x4] sm:$0xf] %v968
          %983 = vst [vmem:[%s980 + $0x8] sm:$0xf] %v972
          %984 = vst [vmem:[%s980 + $0xc] sm:$0xf] %v976
          %v985 = vpack.c.bf16 %v765, %v765
          %v987 = vunpack.c.l.s4 1983009808
          %v988 = vunpack.c.0.s8 %v987
          %v989 = vlaneseq
          %v990 = vshrl.u32 %v989, 7
          %v991 = vsub.s32 %v988, %v990
          %v992 = vrot.slane %v985, %v991
          %v993 = vpack.c.bf16 %v806, %v806
          %v995 = vunpack.c.l.s4 1983009808
          %v996 = vunpack.c.0.s8 %v995
          %v997 = vlaneseq
          %v998 = vshrl.u32 %v997, 7
          %v999 = vsub.s32 %v996, %v998
          %v1000 = vrot.slane %v993, %v999
          %v1001 = vcombine.low %v992, %v1000
          %v1002 = vcombine.high %v992, %v1000
          %v1004 = vunpack.c.l.s4 1934713408
          %v1005 = vunpack.c.0.s8 %v1004
          %v1006 = vlaneseq
          %v1007 = vshrl.u32 %v1006, 7
          %v1008 = vsub.s32 %v1005, %v1007
          %v1009 = vrot.slane %v1001, %v1008
          %v1011 = vunpack.c.l.s4 1934713408
          %v1012 = vunpack.c.0.s8 %v1011
          %v1013 = vlaneseq
          %v1014 = vshrl.u32 %v1013, 7
          %v1015 = vsub.s32 %v1012, %v1014
          %v1016 = vrot.slane %v1002, %v1015
          %v1017 = vcombine.high %v1009, 0
          %v1018 = vcombine.high %v1016, 0
          %v1019 = vpack.c.bf16 %v767, %v767
          %v1021 = vunpack.c.l.s4 1983009808
          %v1022 = vunpack.c.0.s8 %v1021
          %v1023 = vlaneseq
          %v1024 = vshrl.u32 %v1023, 7
          %v1025 = vsub.s32 %v1022, %v1024
          %v1026 = vrot.slane %v1019, %v1025
          %v1027 = vpack.c.bf16 %v808, %v808
          %v1029 = vunpack.c.l.s4 1983009808
          %v1030 = vunpack.c.0.s8 %v1029
          %v1031 = vlaneseq
          %v1032 = vshrl.u32 %v1031, 7
          %v1033 = vsub.s32 %v1030, %v1032
          %v1034 = vrot.slane %v1027, %v1033
          %v1035 = vcombine.low %v1026, %v1034
          %v1036 = vcombine.high %v1026, %v1034
          %v1038 = vunpack.c.l.s4 1934713408
          %v1039 = vunpack.c.0.s8 %v1038
          %v1040 = vlaneseq
          %v1041 = vshrl.u32 %v1040, 7
          %v1042 = vsub.s32 %v1039, %v1041
          %v1043 = vrot.slane %v1035, %v1042
          %v1045 = vunpack.c.l.s4 1934713408
          %v1046 = vunpack.c.0.s8 %v1045
          %v1047 = vlaneseq
          %v1048 = vshrl.u32 %v1047, 7
          %v1049 = vsub.s32 %v1046, %v1048
          %v1050 = vrot.slane %v1036, %v1049
          %v1051 = vcombine.high %v1043, 0
          %v1052 = vcombine.high %v1050, 0
          %v1055 = vpack.i.b16 %v1043, %v1009
          %v1057 = vshrl.u32 %v1009, 16
          %v1058 = vshrl.u32 %v1043, 16
          %v1059 = vpack.i.b16 %v1058, %v1057
          %v1063 = vpack.i.b16 %v1051, %v1017
          %v1065 = vshrl.u32 %v1017, 16
          %v1066 = vshrl.u32 %v1051, 16
          %v1067 = vpack.i.b16 %v1066, %v1065
          %v1071 = vpack.i.b16 %v1050, %v1016
          %v1073 = vshrl.u32 %v1016, 16
          %v1074 = vshrl.u32 %v1050, 16
          %v1075 = vpack.i.b16 %v1074, %v1073
          %v1079 = vpack.i.b16 %v1052, %v1018
          %v1081 = vshrl.u32 %v1018, 16
          %v1082 = vshrl.u32 %v1052, 16
          %v1083 = vpack.i.b16 %v1082, %v1081
          %v1085 = vcombine.low %v1055, %v1071
          %v1087 = vunpack.c.l.s4 1983009808
          %v1088 = vunpack.c.0.s8 %v1087
          %v1089 = vlaneseq
          %v1090 = vshrl.u32 %v1089, 7
          %v1091 = vsub.s32 %v1088, %v1090
          %v1092 = vrot.slane %v1085, %v1091
          %v1093 = vcombine.low %v1063, %v1079
          %v1095 = vunpack.c.l.s4 1983009808
          %v1096 = vunpack.c.0.s8 %v1095
          %v1097 = vlaneseq
          %v1098 = vshrl.u32 %v1097, 7
          %v1099 = vsub.s32 %v1096, %v1098
          %v1100 = vrot.slane %v1093, %v1099
          %v1101 = vcombine.low %v1092, %v1100
          %v1103 = vunpack.c.l.s4 1934713408
          %v1104 = vunpack.c.0.s8 %v1103
          %v1105 = vlaneseq
          %v1106 = vshrl.u32 %v1105, 7
          %v1107 = vsub.s32 %v1104, %v1106
          %v1108 = vrot.slane %v1101, %v1107
          %v1109 = vcombine.high %v1108, 0
          %v1110 = vcombine.low %v1059, %v1075
          %v1112 = vunpack.c.l.s4 1983009808
          %v1113 = vunpack.c.0.s8 %v1112
          %v1114 = vlaneseq
          %v1115 = vshrl.u32 %v1114, 7
          %v1116 = vsub.s32 %v1113, %v1115
          %v1117 = vrot.slane %v1110, %v1116
          %v1118 = vcombine.low %v1067, %v1083
          %v1120 = vunpack.c.l.s4 1983009808
          %v1121 = vunpack.c.0.s8 %v1120
          %v1122 = vlaneseq
          %v1123 = vshrl.u32 %v1122, 7
          %v1124 = vsub.s32 %v1121, %v1123
          %v1125 = vrot.slane %v1118, %v1124
          %v1126 = vcombine.low %v1117, %v1125
          %v1128 = vunpack.c.l.s4 1934713408
          %v1129 = vunpack.c.0.s8 %v1128
          %v1130 = vlaneseq
          %v1131 = vshrl.u32 %v1130, 7
          %v1132 = vsub.s32 %v1129, %v1131
          %v1133 = vrot.slane %v1126, %v1132
          %v1134 = vcombine.high %v1133, 0
          %v1137 = vpack.i.b16 %v1133, %v1108
          %v1139 = vshrl.u32 %v1108, 16
          %v1140 = vshrl.u32 %v1133, 16
          %v1141 = vpack.i.b16 %v1140, %v1139
          %v1145 = vpack.i.b16 %v1134, %v1109
          %v1147 = vshrl.u32 %v1109, 16
          %v1148 = vshrl.u32 %v1134, 16
          %v1149 = vpack.i.b16 %v1148, %v1147
          %s1151 = smul.addr %s978, 4
          %s1152 = scalar_lea.vmem [#allocation4], %s1151
          %1153 = vst [vmem:[%s1152] sm:$0xf] %v1137
          %1154 = vst [vmem:[%s1152 + $0x4] sm:$0xf] %v1141
          %1155 = vst [vmem:[%s1152 + $0x8] sm:$0xf] %v1145
          %1156 = vst [vmem:[%s1152 + $0xc] sm:$0xf] %v1149
        $region88: #{tpu_custom_call.1} parent=59 // pred_fallthru
          _
        %p1157 = scmp.eq.s32.totalorder %s39, 0
        // Predicated region
        $region89: #{tpu_custom_call.1} parent=59 // pred_check
          %p1158 = pneg %p1157
        $region90: #{tpu_custom_call.1} parent=59 // pred_check_branch
          %1160 = sbr.rel (%p1158) target = $region92
        $region91: #{tpu_custom_call.1} parent=59 // pred_region
          %v1161 = vld [vmem:[%s430] sm:$0xff]
          %v1162 = vpack.c.bf16 %v1161, %v1161
          %v1163 = vld [vmem:[#allocation13] sm:$0xff]
          %v1164 = vld [vmem:[#allocation13 + $0x8] sm:$0xff]
          %v1165 = vld [vmem:[#allocation13 + $0x10] sm:$0xff]
          %v1166 = vld [vmem:[#allocation13 + $0x18] sm:$0xff]
          %v1167 = vld [vmem:[#allocation13 + $0x20] sm:$0xff]
          %v1168 = vld [vmem:[#allocation13 + $0x28] sm:$0xff]
          %v1169 = vld [vmem:[#allocation13 + $0x30] sm:$0xff]
          %v1170 = vld [vmem:[#allocation13 + $0x38] sm:$0xff]
          %v1171 = vld [vmem:[%s3] sm:$0xf]
          %v1173 = vlaneseq
          %v1174 = vshrl.u32 %v1173, 7
          %v1175 = vsub.s32 0, %v1174
          %v1176 = vrot.slane %v1171, %v1175
          %v1177 = vlaneseq
          %v1178 = vshrl.u32 %v1177, 7
          %v1179 = vsub.s32 1, %v1178
          %v1180 = vrot.slane %v1171, %v1179
          %v1181 = vlaneseq
          %v1182 = vshrl.u32 %v1181, 7
          %v1183 = vsub.s32 2, %v1182
          %v1184 = vrot.slane %v1171, %v1183
          %v1185 = vlaneseq
          %v1186 = vshrl.u32 %v1185, 7
          %v1187 = vsub.s32 3, %v1186
          %v1188 = vrot.slane %v1171, %v1187
          %v1201 = vunpack.c.l.b16 %v1163
          %v1202 = vunpack.c.h.b16 %v1163
          %v1203 = vunpack.c.l.b16 %v1164
          %v1204 = vunpack.c.h.b16 %v1164
          %v1205 = vunpack.c.l.b16 %v1165
          %v1206 = vunpack.c.h.b16 %v1165
          %v1207 = vunpack.c.l.b16 %v1166
          %v1208 = vunpack.c.h.b16 %v1166
          %v1209 = vunpack.c.l.b16 %v1167
          %v1210 = vunpack.c.h.b16 %v1167
          %v1211 = vunpack.c.l.b16 %v1168
          %v1212 = vunpack.c.h.b16 %v1168
          %v1213 = vunpack.c.l.b16 %v1169
          %v1214 = vunpack.c.h.b16 %v1169
          %v1215 = vunpack.c.l.b16 %v1170
          %v1216 = vunpack.c.h.b16 %v1170
          %v1217 = vpack.c.b16 %v1205, %v1201
          %v1218 = vpack.c.b16 %v1206, %v1202
          %v1219 = vpack.c.b16 %v1207, %v1203
          %v1220 = vpack.c.b16 %v1208, %v1204
          %v1221 = vpack.c.b16 %v1213, %v1209
          %v1222 = vpack.c.b16 %v1214, %v1210
          %v1223 = vpack.c.b16 %v1215, %v1211
          %v1224 = vpack.c.b16 %v1216, %v1212
          %vm1233 = vcmask 261120
          %v1235 = vsel %vm1233, %v1162, 0
          %1237 = vmatprep.subr.bf16.mxu0 %v1218
          %1238 = vmatpush1.bf16.msra.mxu0 %v1217
          %1239 = vmatprep.subr.bf16.mxu0 %v1222
          %1240 = vmatpush1.bf16.msra.mxu0 %v1221
          %1241 = vmatprep.subr.bf16.mxu0 0
          %1242 = vmatpush1.bf16.msra.mxu0 0
          %1243 = vmatprep.subr.bf16.mxu0 0
          %1244 = vmatpush1.bf16.msra.mxu0 0
          %1245 = vmatprep.subr.bf16.mxu0 0
          %1246 = vmatpush1.bf16.msra.mxu0 0
          %1247 = vmatprep.subr.bf16.mxu0 0
          %1248 = vmatpush1.bf16.msra.mxu0 0
          %1249 = vmatprep.subr.bf16.mxu0 0
          %1250 = vmatpush1.bf16.msra.mxu0 0
          %1251 = vmatprep.subr.bf16.mxu0 0
          %1252 = vmatpush1.bf16.msra.mxu0 0
          %1253 = vmatprep.subr.bf16.mxu0 0
          %1254 = vmatpush1.bf16.msra.mxu0 0
          %1255 = vmatprep.subr.bf16.mxu0 0
          %1256 = vmatpush1.bf16.msra.mxu0 0
          %1257 = vmatprep.subr.bf16.mxu0 0
          %1258 = vmatpush1.bf16.msra.mxu0 0
          %1259 = vmatprep.subr.bf16.mxu0 0
          %1260 = vmatpush1.bf16.msra.mxu0 0
          %1261 = vmatprep.subr.bf16.mxu0 0
          %1262 = vmatpush1.bf16.msra.mxu0 0
          %1263 = vmatprep.subr.bf16.mxu0 0
          %1264 = vmatpush1.bf16.msra.mxu0 0
          %1265 = vmatprep.subr.bf16.mxu0 0
          %1266 = vmatpush1.bf16.msra.mxu0 0
          %1267 = vmatprep.subr.bf16.mxu0 0
          %1268 = vmatpush1.bf16.msra.mxu0 0
          %1269 = vmatprep.mubr.bf16.mxu0 0
          %1270 = vmatmul.mubr.bf16.gmra.mrb[0].mxu0 %v1235
          %v1271 = vpop.f32.mrb[0].mxu0
          %v1272 = vadd.f32 %v1176, %v1271
          %v1273 = vpop.f32.mrb[0].mxu0
          %v1274 = vadd.f32 %v1180, %v1273
          %v1275 = vpop.f32.mrb[0].mxu0
          %v1276 = vpop.f32.mrb[0].mxu0
          %1277 = vdwg.mxu0
          %1278 = vmatprep.subr.bf16.mxu0 %v1220
          %1279 = vmatpush1.bf16.msra.mxu0 %v1219
          %1280 = vmatprep.subr.bf16.mxu0 %v1224
          %1281 = vmatpush1.bf16.msra.mxu0 %v1223
          %1282 = vmatprep.subr.bf16.mxu0 0
          %1283 = vmatpush1.bf16.msra.mxu0 0
          %1284 = vmatprep.subr.bf16.mxu0 0
          %1285 = vmatpush1.bf16.msra.mxu0 0
          %1286 = vmatprep.subr.bf16.mxu0 0
          %1287 = vmatpush1.bf16.msra.mxu0 0
          %1288 = vmatprep.subr.bf16.mxu0 0
          %1289 = vmatpush1.bf16.msra.mxu0 0
          %1290 = vmatprep.subr.bf16.mxu0 0
          %1291 = vmatpush1.bf16.msra.mxu0 0
          %1292 = vmatprep.subr.bf16.mxu0 0
          %1293 = vmatpush1.bf16.msra.mxu0 0
          %1294 = vmatprep.subr.bf16.mxu0 0
          %1295 = vmatpush1.bf16.msra.mxu0 0
          %1296 = vmatprep.subr.bf16.mxu0 0
          %1297 = vmatpush1.bf16.msra.mxu0 0
          %1298 = vmatprep.subr.bf16.mxu0 0
          %1299 = vmatpush1.bf16.msra.mxu0 0
          %1300 = vmatprep.subr.bf16.mxu0 0
          %1301 = vmatpush1.bf16.msra.mxu0 0
          %1302 = vmatprep.subr.bf16.mxu0 0
          %1303 = vmatpush1.bf16.msra.mxu0 0
          %1304 = vmatprep.subr.bf16.mxu0 0
          %1305 = vmatpush1.bf16.msra.mxu0 0
          %1306 = vmatprep.subr.bf16.mxu0 0
          %1307 = vmatpush1.bf16.msra.mxu0 0
          %1308 = vmatprep.subr.bf16.mxu0 0
          %1309 = vmatpush1.bf16.msra.mxu0 0
          %1310 = vmatprep.mubr.bf16.mxu0 0
          %1311 = vmatmul.mubr.bf16.gmra.mrb[0].mxu0 %v1235
          %v1312 = vpop.f32.mrb[0].mxu0
          %v1313 = vadd.f32 %v1184, %v1312
          %v1314 = vpop.f32.mrb[0].mxu0
          %v1315 = vadd.f32 %v1188, %v1314
          %v1316 = vpop.f32.mrb[0].mxu0
          %v1317 = vpop.f32.mrb[0].mxu0
          %1318 = vdwg.mxu0
          %v1319 = vpack.c.bf16 %v1272, %v1272
          %v1321 = vunpack.c.l.s4 1983009808
          %v1322 = vunpack.c.0.s8 %v1321
          %v1323 = vlaneseq
          %v1324 = vshrl.u32 %v1323, 7
          %v1325 = vsub.s32 %v1322, %v1324
          %v1326 = vrot.slane %v1319, %v1325
          %v1327 = vpack.c.bf16 %v1313, %v1313
          %v1329 = vunpack.c.l.s4 1983009808
          %v1330 = vunpack.c.0.s8 %v1329
          %v1331 = vlaneseq
          %v1332 = vshrl.u32 %v1331, 7
          %v1333 = vsub.s32 %v1330, %v1332
          %v1334 = vrot.slane %v1327, %v1333
          %v1335 = vcombine.low %v1326, %v1334
          %v1336 = vcombine.high %v1326, %v1334
          %v1338 = vunpack.c.l.s4 1934713408
          %v1339 = vunpack.c.0.s8 %v1338
          %v1340 = vlaneseq
          %v1341 = vshrl.u32 %v1340, 7
          %v1342 = vsub.s32 %v1339, %v1341
          %v1343 = vrot.slane %v1335, %v1342
          %v1345 = vunpack.c.l.s4 1934713408
          %v1346 = vunpack.c.0.s8 %v1345
          %v1347 = vlaneseq
          %v1348 = vshrl.u32 %v1347, 7
          %v1349 = vsub.s32 %v1346, %v1348
          %v1350 = vrot.slane %v1336, %v1349
          %v1351 = vcombine.high %v1343, 0
          %v1352 = vcombine.high %v1350, 0
          %v1353 = vpack.c.bf16 %v1274, %v1274
          %v1355 = vunpack.c.l.s4 1983009808
          %v1356 = vunpack.c.0.s8 %v1355
          %v1357 = vlaneseq
          %v1358 = vshrl.u32 %v1357, 7
          %v1359 = vsub.s32 %v1356, %v1358
          %v1360 = vrot.slane %v1353, %v1359
          %v1361 = vpack.c.bf16 %v1315, %v1315
          %v1363 = vunpack.c.l.s4 1983009808
          %v1364 = vunpack.c.0.s8 %v1363
          %v1365 = vlaneseq
          %v1366 = vshrl.u32 %v1365, 7
          %v1367 = vsub.s32 %v1364, %v1366
          %v1368 = vrot.slane %v1361, %v1367
          %v1369 = vcombine.low %v1360, %v1368
          %v1370 = vcombine.high %v1360, %v1368
          %v1372 = vunpack.c.l.s4 1934713408
          %v1373 = vunpack.c.0.s8 %v1372
          %v1374 = vlaneseq
          %v1375 = vshrl.u32 %v1374, 7
          %v1376 = vsub.s32 %v1373, %v1375
          %v1377 = vrot.slane %v1369, %v1376
          %v1379 = vunpack.c.l.s4 1934713408
          %v1380 = vunpack.c.0.s8 %v1379
          %v1381 = vlaneseq
          %v1382 = vshrl.u32 %v1381, 7
          %v1383 = vsub.s32 %v1380, %v1382
          %v1384 = vrot.slane %v1370, %v1383
          %v1385 = vcombine.high %v1377, 0
          %v1386 = vcombine.high %v1384, 0
          %v1389 = vpack.i.b16 %v1377, %v1343
          %v1391 = vshrl.u32 %v1343, 16
          %v1392 = vshrl.u32 %v1377, 16
          %v1393 = vpack.i.b16 %v1392, %v1391
          %v1397 = vpack.i.b16 %v1385, %v1351
          %v1399 = vshrl.u32 %v1351, 16
          %v1400 = vshrl.u32 %v1385, 16
          %v1401 = vpack.i.b16 %v1400, %v1399
          %v1405 = vpack.i.b16 %v1384, %v1350
          %v1407 = vshrl.u32 %v1350, 16
          %v1408 = vshrl.u32 %v1384, 16
          %v1409 = vpack.i.b16 %v1408, %v1407
          %v1413 = vpack.i.b16 %v1386, %v1352
          %v1415 = vshrl.u32 %v1352, 16
          %v1416 = vshrl.u32 %v1386, 16
          %v1417 = vpack.i.b16 %v1416, %v1415
          %v1419 = vcombine.low %v1389, %v1405
          %v1421 = vunpack.c.l.s4 1983009808
          %v1422 = vunpack.c.0.s8 %v1421
          %v1423 = vlaneseq
          %v1424 = vshrl.u32 %v1423, 7
          %v1425 = vsub.s32 %v1422, %v1424
          %v1426 = vrot.slane %v1419, %v1425
          %v1427 = vcombine.low %v1397, %v1413
          %v1429 = vunpack.c.l.s4 1983009808
          %v1430 = vunpack.c.0.s8 %v1429
          %v1431 = vlaneseq
          %v1432 = vshrl.u32 %v1431, 7
          %v1433 = vsub.s32 %v1430, %v1432
          %v1434 = vrot.slane %v1427, %v1433
          %v1435 = vcombine.low %v1426, %v1434
          %v1437 = vunpack.c.l.s4 1934713408
          %v1438 = vunpack.c.0.s8 %v1437
          %v1439 = vlaneseq
          %v1440 = vshrl.u32 %v1439, 7
          %v1441 = vsub.s32 %v1438, %v1440
          %v1442 = vrot.slane %v1435, %v1441
          %v1443 = vcombine.high %v1442, 0
          %v1444 = vcombine.low %v1393, %v1409
          %v1446 = vunpack.c.l.s4 1983009808
          %v1447 = vunpack.c.0.s8 %v1446
          %v1448 = vlaneseq
          %v1449 = vshrl.u32 %v1448, 7
          %v1450 = vsub.s32 %v1447, %v1449
          %v1451 = vrot.slane %v1444, %v1450
          %v1452 = vcombine.low %v1401, %v1417
          %v1454 = vunpack.c.l.s4 1983009808
          %v1455 = vunpack.c.0.s8 %v1454
          %v1456 = vlaneseq
          %v1457 = vshrl.u32 %v1456, 7
          %v1458 = vsub.s32 %v1455, %v1457
          %v1459 = vrot.slane %v1452, %v1458
          %v1460 = vcombine.low %v1451, %v1459
          %v1462 = vunpack.c.l.s4 1934713408
          %v1463 = vunpack.c.0.s8 %v1462
          %v1464 = vlaneseq
          %v1465 = vshrl.u32 %v1464, 7
          %v1466 = vsub.s32 %v1463, %v1465
          %v1467 = vrot.slane %v1460, %v1466
          %v1468 = vcombine.high %v1467, 0
          %v1471 = vpack.i.b16 %v1467, %v1442
          %v1473 = vshrl.u32 %v1442, 16
          %v1474 = vshrl.u32 %v1467, 16
          %v1475 = vpack.i.b16 %v1474, %v1473
          %v1479 = vpack.i.b16 %v1468, %v1443
          %v1481 = vshrl.u32 %v1443, 16
          %v1482 = vshrl.u32 %v1468, 16
          %v1483 = vpack.i.b16 %v1482, %v1481
          %1485 = vst [vmem:[#allocation2] sm:$0xf] %v1471
          %1486 = vst [vmem:[#allocation2 + $0x4] sm:$0xf] %v1475
          %1487 = vst [vmem:[#allocation2 + $0x8] sm:$0xf] %v1479
          %1488 = vst [vmem:[#allocation2 + $0xc] sm:$0xf] %v1483
          %vm1489 = vcmask 7168
          %1490 = vst.msk [vmem:[#allocation5] sm:$0xff] %vm1489, -inf
          %1491 = vst.msk [vmem:[#allocation5 + $0x8] sm:$0xff] %vm1489, -inf
          %1492 = vst.msk [vmem:[#allocation5 + $0x10] sm:$0xff] %vm1489, -inf
          %1493 = vst.msk [vmem:[#allocation5 + $0x18] sm:$0xff] %vm1489, -inf
          %1494 = vst.msk [vmem:[#allocation6] sm:$0xff] %vm1489, 0.0
          %1495 = vst.msk [vmem:[#allocation6 + $0x8] sm:$0xff] %vm1489, 0.0
          %1496 = vst.msk [vmem:[#allocation6 + $0x10] sm:$0xff] %vm1489, 0.0
          %1497 = vst.msk [vmem:[#allocation6 + $0x18] sm:$0xff] %vm1489, 0.0
          %1498 = vst [vmem:[#allocation7] sm:$0xff] 0.0
          %1499 = vst [vmem:[#allocation7 + $0x8] sm:$0xff] 0.0
          %1500 = vst [vmem:[#allocation7 + $0x10] sm:$0xff] 0.0
          %1501 = vst [vmem:[#allocation7 + $0x18] sm:$0xff] 0.0
        $region92: #{tpu_custom_call.1} parent=59 // pred_fallthru
          _
        %v1502 = vld [vmem:[#allocation2] sm:$0xf]
        %v1503 = vld [vmem:[#allocation2 + $0x4] sm:$0xf]
        %v1504 = vld [vmem:[#allocation2 + $0x8] sm:$0xf]
        %v1505 = vld [vmem:[#allocation2 + $0xc] sm:$0xf]
        %s1506 = smul.u32 %s39, 4
        %s1507 = smul.addr %s1506, 4
        %s1508 = scalar_lea.vmem [#allocation3], %s1507
        %v1509 = vld [vmem:[%s1508] sm:$0xf]
        %v1510 = vld [vmem:[%s1508 + $0x4] sm:$0xf]
        %v1511 = vld [vmem:[%s1508 + $0x8] sm:$0xf]
        %v1512 = vld [vmem:[%s1508 + $0xc] sm:$0xf]
        %s1513 = smul.addr %s1506, 4
        %s1514 = scalar_lea.vmem [#allocation4], %s1513
        %v1515 = vld [vmem:[%s1514] sm:$0xf]
        %v1516 = vld [vmem:[%s1514 + $0x4] sm:$0xf]
        %v1517 = vld [vmem:[%s1514 + $0x8] sm:$0xf]
        %v1518 = vld [vmem:[%s1514 + $0xc] sm:$0xf]
        %1519 = vmatprep.subr.bf16.mxu0 0
        %1520 = vmatpush1.bf16.xpose.msra.mxu0 %v1509
        %1521 = vmatprep.subr.bf16.mxu0 0
        %1522 = vmatpush1.bf16.xpose.msra.mxu0 0
        %1523 = vmatprep.subr.bf16.mxu0 0
        %1524 = vmatpush1.bf16.xpose.msra.mxu0 0
        %1525 = vmatprep.subr.bf16.mxu0 0
        %1526 = vmatpush1.bf16.xpose.msra.mxu0 0
        %1527 = vmatprep.subr.bf16.mxu0 0
        %1528 = vmatpush1.bf16.xpose.msra.mxu0 0
        %1529 = vmatprep.subr.bf16.mxu0 0
        %1530 = vmatpush1.bf16.xpose.msra.mxu0 0
        %1531 = vmatprep.subr.bf16.mxu0 0
        %1532 = vmatpush1.bf16.xpose.msra.mxu0 0
        %1533 = vmatprep.subr.bf16.mxu0 0
        %1534 = vmatpush1.bf16.xpose.msra.mxu0 0
        %1535 = vmatprep.subr.bf16.mxu0 0
        %1536 = vmatpush1.bf16.xpose.msra.mxu0 0
        %1537 = vmatprep.subr.bf16.mxu0 0
        %1538 = vmatpush1.bf16.xpose.msra.mxu0 0
        %1539 = vmatprep.subr.bf16.mxu0 0
        %1540 = vmatpush1.bf16.xpose.msra.mxu0 0
        %1541 = vmatprep.subr.bf16.mxu0 0
        %1542 = vmatpush1.bf16.xpose.msra.mxu0 0
        %1543 = vmatprep.subr.bf16.mxu0 0
        %1544 = vmatpush1.bf16.xpose.msra.mxu0 0
        %1545 = vmatprep.subr.bf16.mxu0 0
        %1546 = vmatpush1.bf16.xpose.msra.mxu0 0
        %1547 = vmatprep.subr.bf16.mxu0 0
        %1548 = vmatpush1.bf16.xpose.msra.mxu0 0
        %1549 = vmatprep.subr.bf16.mxu0 0
        %1550 = vmatpush1.bf16.xpose.msra.mxu0 0
        %1551 = vmatprep.mubr.bf16.mxu0 0
        %1552 = vmatmul.mubr.bf16.gmra.mrb[0].mxu0 %v1502
        %v1553 = vpop.f32.mrb[0].mxu0
        %v1554 = vadd.f32 0.0, %v1553
        %v1555 = vpop.f32.mrb[0].mxu0
        %v1556 = vpop.f32.mrb[0].mxu0
        %v1557 = vpop.f32.mrb[0].mxu0
        %1558 = vdwg.mxu0
        %1559 = vmatprep.subr.bf16.mxu0 0
        %1560 = vmatpush1.bf16.xpose.msra.mxu0 %v1510
        %1561 = vmatprep.subr.bf16.mxu0 0
        %1562 = vmatpush1.bf16.xpose.msra.mxu0 0
        %1563 = vmatprep.subr.bf16.mxu0 0
        %1564 = vmatpush1.bf16.xpose.msra.mxu0 0
        %1565 = vmatprep.subr.bf16.mxu0 0
        %1566 = vmatpush1.bf16.xpose.msra.mxu0 0
        %1567 = vmatprep.subr.bf16.mxu0 0
        %1568 = vmatpush1.bf16.xpose.msra.mxu0 0
        %1569 = vmatprep.subr.bf16.mxu0 0
        %1570 = vmatpush1.bf16.xpose.msra.mxu0 0
        %1571 = vmatprep.subr.bf16.mxu0 0
        %1572 = vmatpush1.bf16.xpose.msra.mxu0 0
        %1573 = vmatprep.subr.bf16.mxu0 0
        %1574 = vmatpush1.bf16.xpose.msra.mxu0 0
        %1575 = vmatprep.subr.bf16.mxu0 0
        %1576 = vmatpush1.bf16.xpose.msra.mxu0 0
        %1577 = vmatprep.subr.bf16.mxu0 0
        %1578 = vmatpush1.bf16.xpose.msra.mxu0 0
        %1579 = vmatprep.subr.bf16.mxu0 0
        %1580 = vmatpush1.bf16.xpose.msra.mxu0 0
        %1581 = vmatprep.subr.bf16.mxu0 0
        %1582 = vmatpush1.bf16.xpose.msra.mxu0 0
        %1583 = vmatprep.subr.bf16.mxu0 0
        %1584 = vmatpush1.bf16.xpose.msra.mxu0 0
        %1585 = vmatprep.subr.bf16.mxu0 0
        %1586 = vmatpush1.bf16.xpose.msra.mxu0 0
        %1587 = vmatprep.subr.bf16.mxu0 0
        %1588 = vmatpush1.bf16.xpose.msra.mxu0 0
        %1589 = vmatprep.subr.bf16.mxu0 0
        %1590 = vmatpush1.bf16.xpose.msra.mxu0 0
        %1591 = vmatprep.mubr.bf16.mxu0 0
        %1592 = vmatmul.mubr.bf16.gmra.mrb[0].mxu0 %v1503
        %v1593 = vpop.f32.mrb[0].mxu0
        %v1594 = vadd.f32 0.0, %v1593
        %v1595 = vpop.f32.mrb[0].mxu0
        %v1596 = vpop.f32.mrb[0].mxu0
        %v1597 = vpop.f32.mrb[0].mxu0
        %1598 = vdwg.mxu0
        %1599 = vmatprep.subr.bf16.mxu0 0
        %1600 = vmatpush1.bf16.xpose.msra.mxu0 %v1511
        %1601 = vmatprep.subr.bf16.mxu0 0
        %1602 = vmatpush1.bf16.xpose.msra.mxu0 0
        %1603 = vmatprep.subr.bf16.mxu0 0
        %1604 = vmatpush1.bf16.xpose.msra.mxu0 0
        %1605 = vmatprep.subr.bf16.mxu0 0
        %1606 = vmatpush1.bf16.xpose.msra.mxu0 0
        %1607 = vmatprep.subr.bf16.mxu0 0
        %1608 = vmatpush1.bf16.xpose.msra.mxu0 0
        %1609 = vmatprep.subr.bf16.mxu0 0
        %1610 = vmatpush1.bf16.xpose.msra.mxu0 0
        %1611 = vmatprep.subr.bf16.mxu0 0
        %1612 = vmatpush1.bf16.xpose.msra.mxu0 0
        %1613 = vmatprep.subr.bf16.mxu0 0
        %1614 = vmatpush1.bf16.xpose.msra.mxu0 0
        %1615 = vmatprep.subr.bf16.mxu0 0
        %1616 = vmatpush1.bf16.xpose.msra.mxu0 0
        %1617 = vmatprep.subr.bf16.mxu0 0
        %1618 = vmatpush1.bf16.xpose.msra.mxu0 0
        %1619 = vmatprep.subr.bf16.mxu0 0
        %1620 = vmatpush1.bf16.xpose.msra.mxu0 0
        %1621 = vmatprep.subr.bf16.mxu0 0
        %1622 = vmatpush1.bf16.xpose.msra.mxu0 0
        %1623 = vmatprep.subr.bf16.mxu0 0
        %1624 = vmatpush1.bf16.xpose.msra.mxu0 0
        %1625 = vmatprep.subr.bf16.mxu0 0
        %1626 = vmatpush1.bf16.xpose.msra.mxu0 0
        %1627 = vmatprep.subr.bf16.mxu0 0
        %1628 = vmatpush1.bf16.xpose.msra.mxu0 0
        %1629 = vmatprep.subr.bf16.mxu0 0
        %1630 = vmatpush1.bf16.xpose.msra.mxu0 0
        %1631 = vmatprep.mubr.bf16.mxu0 0
        %1632 = vmatmul.mubr.bf16.gmra.mrb[0].mxu0 %v1504
        %v1633 = vpop.f32.mrb[0].mxu0
        %v1634 = vadd.f32 0.0, %v1633
        %v1635 = vpop.f32.mrb[0].mxu0
        %v1636 = vpop.f32.mrb[0].mxu0
        %v1637 = vpop.f32.mrb[0].mxu0
        %1638 = vdwg.mxu0
        %1639 = vmatprep.subr.bf16.mxu0 0
        %1640 = vmatpush1.bf16.xpose.msra.mxu0 %v1512
        %1641 = vmatprep.subr.bf16.mxu0 0
        %1642 = vmatpush1.bf16.xpose.msra.mxu0 0
        %1643 = vmatprep.subr.bf16.mxu0 0
        %1644 = vmatpush1.bf16.xpose.msra.mxu0 0
        %1645 = vmatprep.subr.bf16.mxu0 0
        %1646 = vmatpush1.bf16.xpose.msra.mxu0 0
        %1647 = vmatprep.subr.bf16.mxu0 0
        %1648 = vmatpush1.bf16.xpose.msra.mxu0 0
        %1649 = vmatprep.subr.bf16.mxu0 0
        %1650 = vmatpush1.bf16.xpose.msra.mxu0 0
        %1651 = vmatprep.subr.bf16.mxu0 0
        %1652 = vmatpush1.bf16.xpose.msra.mxu0 0
        %1653 = vmatprep.subr.bf16.mxu0 0
        %1654 = vmatpush1.bf16.xpose.msra.mxu0 0
        %1655 = vmatprep.subr.bf16.mxu0 0
        %1656 = vmatpush1.bf16.xpose.msra.mxu0 0
        %1657 = vmatprep.subr.bf16.mxu0 0
        %1658 = vmatpush1.bf16.xpose.msra.mxu0 0
        %1659 = vmatprep.subr.bf16.mxu0 0
        %1660 = vmatpush1.bf16.xpose.msra.mxu0 0
        %1661 = vmatprep.subr.bf16.mxu0 0
        %1662 = vmatpush1.bf16.xpose.msra.mxu0 0
        %1663 = vmatprep.subr.bf16.mxu0 0
        %1664 = vmatpush1.bf16.xpose.msra.mxu0 0
        %1665 = vmatprep.subr.bf16.mxu0 0
        %1666 = vmatpush1.bf16.xpose.msra.mxu0 0
        %1667 = vmatprep.subr.bf16.mxu0 0
        %1668 = vmatpush1.bf16.xpose.msra.mxu0 0
        %1669 = vmatprep.subr.bf16.mxu0 0
        %1670 = vmatpush1.bf16.xpose.msra.mxu0 0
        %1671 = vmatprep.mubr.bf16.mxu0 0
        %1672 = vmatmul.mubr.bf16.gmra.mrb[0].mxu0 %v1505
        %v1673 = vpop.f32.mrb[0].mxu0
        %v1674 = vadd.f32 0.0, %v1673
        %v1675 = vpop.f32.mrb[0].mxu0
        %v1676 = vpop.f32.mrb[0].mxu0
        %v1677 = vpop.f32.mrb[0].mxu0
        %1678 = vdwg.mxu0
        %v1679 = vld [vmem:[#allocation5] sm:$0xff]
        %v1680 = vld [vmem:[#allocation5 + $0x8] sm:$0xff]
        %v1681 = vld [vmem:[#allocation5 + $0x10] sm:$0xff]
        %v1682 = vld [vmem:[#allocation5 + $0x18] sm:$0xff]
        %vm1683 = vcmask 64512
        %v1684 = vsel %vm1683, %v1554, -inf
        %1685 = vmax.xlane.f32.xlu0 %v1684
        %v1686 = vpop.xlane.xlu0 %1685
        %v1687 = vsel %vm1683, %v1594, -inf
        %1688 = vmax.xlane.f32.xlu0 %v1687
        %v1689 = vpop.xlane.xlu0 %1688
        %v1690 = vsel %vm1683, %v1634, -inf
        %1691 = vmax.xlane.f32.xlu0 %v1690
        %v1692 = vpop.xlane.xlu0 %1691
        %v1693 = vsel %vm1683, %v1674, -inf
        %1694 = vmax.xlane.f32.xlu0 %v1693
        %v1695 = vpop.xlane.xlu0 %1694
        %v1696 = vmax.f32 %v1679, %v1686
        %v1697 = vmax.f32 %v1680, %v1689
        %v1698 = vmax.f32 %v1681, %v1692
        %v1699 = vmax.f32 %v1682, %v1695
        %v1700 = vsub.f32 %v1679, %v1696
        %v1701 = vsub.f32 %v1680, %v1697
        %v1702 = vsub.f32 %v1681, %v1698
        %v1703 = vsub.f32 %v1682, %v1699
        %v1704 = vmul.f32 %v1700, 1.442695
        %v1705 = vpow.pop %v1704
        %v1706 = vmul.f32 %v1701, 1.442695
        %v1707 = vpow.pop %v1706
        %v1708 = vmul.f32 %v1702, 1.442695
        %v1709 = vpow.pop %v1708
        %v1710 = vmul.f32 %v1703, 1.442695
        %v1711 = vpow.pop %v1710
        %1713 = vset.pattern.permute.xlu0 0
        %1714 = vperm.xlu0 %1713, %v1696
        %v1715 = vpop.permute.xlu0 %1714
        %1718 = vset.pattern.permute.xlu0 0
        %1719 = vperm.xlu0 %1718, %v1697
        %v1720 = vpop.permute.xlu0 %1719
        %1723 = vset.pattern.permute.xlu0 0
        %1724 = vperm.xlu0 %1723, %v1698
        %v1725 = vpop.permute.xlu0 %1724
        %1728 = vset.pattern.permute.xlu0 0
        %1729 = vperm.xlu0 %1728, %v1699
        %v1730 = vpop.permute.xlu0 %1729
        %v1732 = vsub.f32 %v1554, %v1715
        %v1733 = vsub.f32 %v1594, %v1720
        %v1734 = vsub.f32 %v1634, %v1725
        %v1735 = vsub.f32 %v1674, %v1730
        %v1736 = vmul.f32 %v1732, 1.442695
        %v1737 = vpow.pop %v1736
        %v1738 = vmul.f32 %v1733, 1.442695
        %v1739 = vpow.pop %v1738
        %v1740 = vmul.f32 %v1734, 1.442695
        %v1741 = vpow.pop %v1740
        %v1742 = vmul.f32 %v1735, 1.442695
        %v1743 = vpow.pop %v1742
        %v1744 = vld [vmem:[#allocation6] sm:$0xff]
        %v1745 = vld [vmem:[#allocation6 + $0x8] sm:$0xff]
        %v1746 = vld [vmem:[#allocation6 + $0x10] sm:$0xff]
        %v1747 = vld [vmem:[#allocation6 + $0x18] sm:$0xff]
        %v1748 = vmul.f32 %v1705, %v1744
        %v1749 = vmul.f32 %v1707, %v1745
        %v1750 = vmul.f32 %v1709, %v1746
        %v1751 = vmul.f32 %v1711, %v1747
        %v1752 = vsel %vm1683, %v1737, 0.0
        %1753 = vadd.xlane.f32.xlu0 %v1752
        %v1754 = vpop.xlane.xlu0 %1753
        %v1755 = vsel %vm1683, %v1739, 0.0
        %1756 = vadd.xlane.f32.xlu0 %v1755
        %v1757 = vpop.xlane.xlu0 %1756
        %v1758 = vsel %vm1683, %v1741, 0.0
        %1759 = vadd.xlane.f32.xlu0 %v1758
        %v1760 = vpop.xlane.xlu0 %1759
        %v1761 = vsel %vm1683, %v1743, 0.0
        %1762 = vadd.xlane.f32.xlu0 %v1761
        %v1763 = vpop.xlane.xlu0 %1762
        %v1764 = vadd.f32 %v1748, %v1754
        %v1765 = vadd.f32 %v1749, %v1757
        %v1766 = vadd.f32 %v1750, %v1760
        %v1767 = vadd.f32 %v1751, %v1763
        %vm1768 = vcmask 7168
        %1769 = vst.msk [vmem:[#allocation6] sm:$0xff] %vm1768, %v1764
        %1770 = vst.msk [vmem:[#allocation6 + $0x8] sm:$0xff] %vm1768, %v1765
        %1771 = vst.msk [vmem:[#allocation6 + $0x10] sm:$0xff] %vm1768, %v1766
        %1772 = vst.msk [vmem:[#allocation6 + $0x18] sm:$0xff] %vm1768, %v1767
        %v1773 = vld [vmem:[#allocation7] sm:$0xff]
        %v1774 = vld [vmem:[#allocation7 + $0x8] sm:$0xff]
        %v1775 = vld [vmem:[#allocation7 + $0x10] sm:$0xff]
        %v1776 = vld [vmem:[#allocation7 + $0x18] sm:$0xff]
        %1778 = vset.pattern.permute.xlu0 0
        %1779 = vperm.xlu0 %1778, %v1705
        %v1780 = vpop.permute.xlu0 %1779
        %1783 = vset.pattern.permute.xlu0 0
        %1784 = vperm.xlu0 %1783, %v1707
        %v1785 = vpop.permute.xlu0 %1784
        %1788 = vset.pattern.permute.xlu0 0
        %1789 = vperm.xlu0 %1788, %v1709
        %v1790 = vpop.permute.xlu0 %1789
        %1793 = vset.pattern.permute.xlu0 0
        %1794 = vperm.xlu0 %1793, %v1711
        %v1795 = vpop.permute.xlu0 %1794
        %v1797 = vmul.f32 %v1780, %v1773
        %v1798 = vmul.f32 %v1785, %v1774
        %v1799 = vmul.f32 %v1790, %v1775
        %v1800 = vmul.f32 %v1795, %v1776
        %v1801 = vpack.c.bf16 %v1737, %v1737
        %v1802 = vpack.c.bf16 %v1739, %v1739
        %v1803 = vpack.c.bf16 %v1741, %v1741
        %v1804 = vpack.c.bf16 %v1743, %v1743
        %v1806 = vsel %vm1683, %v1801, 0
        %vm1808 = vcmask 1043456
        %v1810 = vsel %vm1808, %v1515, 0
        %1812 = vmatprep.subr.bf16.mxu0 0
        %1813 = vmatpush1.bf16.msra.mxu0 %v1810
        %1814 = vmatprep.subr.bf16.mxu0 0
        %1815 = vmatpush1.bf16.msra.mxu0 0
        %1816 = vmatprep.subr.bf16.mxu0 0
        %1817 = vmatpush1.bf16.msra.mxu0 0
        %1818 = vmatprep.subr.bf16.mxu0 0
        %1819 = vmatpush1.bf16.msra.mxu0 0
        %1820 = vmatprep.subr.bf16.mxu0 0
        %1821 = vmatpush1.bf16.msra.mxu0 0
        %1822 = vmatprep.subr.bf16.mxu0 0
        %1823 = vmatpush1.bf16.msra.mxu0 0
        %1824 = vmatprep.subr.bf16.mxu0 0
        %1825 = vmatpush1.bf16.msra.mxu0 0
        %1826 = vmatprep.subr.bf16.mxu0 0
        %1827 = vmatpush1.bf16.msra.mxu0 0
        %1828 = vmatprep.subr.bf16.mxu0 0
        %1829 = vmatpush1.bf16.msra.mxu0 0
        %1830 = vmatprep.subr.bf16.mxu0 0
        %1831 = vmatpush1.bf16.msra.mxu0 0
        %1832 = vmatprep.subr.bf16.mxu0 0
        %1833 = vmatpush1.bf16.msra.mxu0 0
        %1834 = vmatprep.subr.bf16.mxu0 0
        %1835 = vmatpush1.bf16.msra.mxu0 0
        %1836 = vmatprep.subr.bf16.mxu0 0
        %1837 = vmatpush1.bf16.msra.mxu0 0
        %1838 = vmatprep.subr.bf16.mxu0 0
        %1839 = vmatpush1.bf16.msra.mxu0 0
        %1840 = vmatprep.subr.bf16.mxu0 0
        %1841 = vmatpush1.bf16.msra.mxu0 0
        %1842 = vmatprep.subr.bf16.mxu0 0
        %1843 = vmatpush1.bf16.msra.mxu0 0
        %1844 = vmatprep.mubr.bf16.mxu0 0
        %1845 = vmatmul.mubr.bf16.gmra.mrb[0].mxu0 %v1806
        %v1846 = vpop.f32.mrb[0].mxu0
        %v1847 = vadd.f32 0.0, %v1846
        %v1848 = vpop.f32.mrb[0].mxu0
        %v1849 = vpop.f32.mrb[0].mxu0
        %v1850 = vpop.f32.mrb[0].mxu0
        %1851 = vdwg.mxu0
        %v1853 = vsel %vm1683, %v1802, 0
        %v1856 = vsel %vm1808, %v1516, 0
        %1858 = vmatprep.subr.bf16.mxu0 0
        %1859 = vmatpush1.bf16.msra.mxu0 %v1856
        %1860 = vmatprep.subr.bf16.mxu0 0
        %1861 = vmatpush1.bf16.msra.mxu0 0
        %1862 = vmatprep.subr.bf16.mxu0 0
        %1863 = vmatpush1.bf16.msra.mxu0 0
        %1864 = vmatprep.subr.bf16.mxu0 0
        %1865 = vmatpush1.bf16.msra.mxu0 0
        %1866 = vmatprep.subr.bf16.mxu0 0
        %1867 = vmatpush1.bf16.msra.mxu0 0
        %1868 = vmatprep.subr.bf16.mxu0 0
        %1869 = vmatpush1.bf16.msra.mxu0 0
        %1870 = vmatprep.subr.bf16.mxu0 0
        %1871 = vmatpush1.bf16.msra.mxu0 0
        %1872 = vmatprep.subr.bf16.mxu0 0
        %1873 = vmatpush1.bf16.msra.mxu0 0
        %1874 = vmatprep.subr.bf16.mxu0 0
        %1875 = vmatpush1.bf16.msra.mxu0 0
        %1876 = vmatprep.subr.bf16.mxu0 0
        %1877 = vmatpush1.bf16.msra.mxu0 0
        %1878 = vmatprep.subr.bf16.mxu0 0
        %1879 = vmatpush1.bf16.msra.mxu0 0
        %1880 = vmatprep.subr.bf16.mxu0 0
        %1881 = vmatpush1.bf16.msra.mxu0 0
        %1882 = vmatprep.subr.bf16.mxu0 0
        %1883 = vmatpush1.bf16.msra.mxu0 0
        %1884 = vmatprep.subr.bf16.mxu0 0
        %1885 = vmatpush1.bf16.msra.mxu0 0
        %1886 = vmatprep.subr.bf16.mxu0 0
        %1887 = vmatpush1.bf16.msra.mxu0 0
        %1888 = vmatprep.subr.bf16.mxu0 0
        %1889 = vmatpush1.bf16.msra.mxu0 0
        %1890 = vmatprep.mubr.bf16.mxu0 0
        %1891 = vmatmul.mubr.bf16.gmra.mrb[0].mxu0 %v1853
        %v1892 = vpop.f32.mrb[0].mxu0
        %v1893 = vadd.f32 0.0, %v1892
        %v1894 = vpop.f32.mrb[0].mxu0
        %v1895 = vpop.f32.mrb[0].mxu0
        %v1896 = vpop.f32.mrb[0].mxu0
        %1897 = vdwg.mxu0
        %v1899 = vsel %vm1683, %v1803, 0
        %v1902 = vsel %vm1808, %v1517, 0
        %1904 = vmatprep.subr.bf16.mxu0 0
        %1905 = vmatpush1.bf16.msra.mxu0 %v1902
        %1906 = vmatprep.subr.bf16.mxu0 0
        %1907 = vmatpush1.bf16.msra.mxu0 0
        %1908 = vmatprep.subr.bf16.mxu0 0
        %1909 = vmatpush1.bf16.msra.mxu0 0
        %1910 = vmatprep.subr.bf16.mxu0 0
        %1911 = vmatpush1.bf16.msra.mxu0 0
        %1912 = vmatprep.subr.bf16.mxu0 0
        %1913 = vmatpush1.bf16.msra.mxu0 0
        %1914 = vmatprep.subr.bf16.mxu0 0
        %1915 = vmatpush1.bf16.msra.mxu0 0
        %1916 = vmatprep.subr.bf16.mxu0 0
        %1917 = vmatpush1.bf16.msra.mxu0 0
        %1918 = vmatprep.subr.bf16.mxu0 0
        %1919 = vmatpush1.bf16.msra.mxu0 0
        %1920 = vmatprep.subr.bf16.mxu0 0
        %1921 = vmatpush1.bf16.msra.mxu0 0
        %1922 = vmatprep.subr.bf16.mxu0 0
        %1923 = vmatpush1.bf16.msra.mxu0 0
        %1924 = vmatprep.subr.bf16.mxu0 0
        %1925 = vmatpush1.bf16.msra.mxu0 0
        %1926 = vmatprep.subr.bf16.mxu0 0
        %1927 = vmatpush1.bf16.msra.mxu0 0
        %1928 = vmatprep.subr.bf16.mxu0 0
        %1929 = vmatpush1.bf16.msra.mxu0 0
        %1930 = vmatprep.subr.bf16.mxu0 0
        %1931 = vmatpush1.bf16.msra.mxu0 0
        %1932 = vmatprep.subr.bf16.mxu0 0
        %1933 = vmatpush1.bf16.msra.mxu0 0
        %1934 = vmatprep.subr.bf16.mxu0 0
        %1935 = vmatpush1.bf16.msra.mxu0 0
        %1936 = vmatprep.mubr.bf16.mxu0 0
        %1937 = vmatmul.mubr.bf16.gmra.mrb[0].mxu0 %v1899
        %v1938 = vpop.f32.mrb[0].mxu0
        %v1939 = vadd.f32 0.0, %v1938
        %v1940 = vpop.f32.mrb[0].mxu0
        %v1941 = vpop.f32.mrb[0].mxu0
        %v1942 = vpop.f32.mrb[0].mxu0
        %1943 = vdwg.mxu0
        %v1945 = vsel %vm1683, %v1804, 0
        %v1948 = vsel %vm1808, %v1518, 0
        %1950 = vmatprep.subr.bf16.mxu0 0
        %1951 = vmatpush1.bf16.msra.mxu0 %v1948
        %1952 = vmatprep.subr.bf16.mxu0 0
        %1953 = vmatpush1.bf16.msra.mxu0 0
        %1954 = vmatprep.subr.bf16.mxu0 0
        %1955 = vmatpush1.bf16.msra.mxu0 0
        %1956 = vmatprep.subr.bf16.mxu0 0
        %1957 = vmatpush1.bf16.msra.mxu0 0
        %1958 = vmatprep.subr.bf16.mxu0 0
        %1959 = vmatpush1.bf16.msra.mxu0 0
        %1960 = vmatprep.subr.bf16.mxu0 0
        %1961 = vmatpush1.bf16.msra.mxu0 0
        %1962 = vmatprep.subr.bf16.mxu0 0
        %1963 = vmatpush1.bf16.msra.mxu0 0
        %1964 = vmatprep.subr.bf16.mxu0 0
        %1965 = vmatpush1.bf16.msra.mxu0 0
        %1966 = vmatprep.subr.bf16.mxu0 0
        %1967 = vmatpush1.bf16.msra.mxu0 0
        %1968 = vmatprep.subr.bf16.mxu0 0
        %1969 = vmatpush1.bf16.msra.mxu0 0
        %1970 = vmatprep.subr.bf16.mxu0 0
        %1971 = vmatpush1.bf16.msra.mxu0 0
        %1972 = vmatprep.subr.bf16.mxu0 0
        %1973 = vmatpush1.bf16.msra.mxu0 0
        %1974 = vmatprep.subr.bf16.mxu0 0
        %1975 = vmatpush1.bf16.msra.mxu0 0
        %1976 = vmatprep.subr.bf16.mxu0 0
        %1977 = vmatpush1.bf16.msra.mxu0 0
        %1978 = vmatprep.subr.bf16.mxu0 0
        %1979 = vmatpush1.bf16.msra.mxu0 0
        %1980 = vmatprep.subr.bf16.mxu0 0
        %1981 = vmatpush1.bf16.msra.mxu0 0
        %1982 = vmatprep.mubr.bf16.mxu0 0
        %1983 = vmatmul.mubr.bf16.gmra.mrb[0].mxu0 %v1945
        %v1984 = vpop.f32.mrb[0].mxu0
        %v1985 = vadd.f32 0.0, %v1984
        %v1986 = vpop.f32.mrb[0].mxu0
        %v1987 = vpop.f32.mrb[0].mxu0
        %v1988 = vpop.f32.mrb[0].mxu0
        %1989 = vdwg.mxu0
        %v1990 = vadd.f32 %v1797, %v1847
        %v1991 = vadd.f32 %v1798, %v1893
        %v1992 = vadd.f32 %v1799, %v1939
        %v1993 = vadd.f32 %v1800, %v1985
        %1994 = vst [vmem:[#allocation7] sm:$0xff] %v1990
        %1995 = vst [vmem:[#allocation7 + $0x8] sm:$0xff] %v1991
        %1996 = vst [vmem:[#allocation7 + $0x10] sm:$0xff] %v1992
        %1997 = vst [vmem:[#allocation7 + $0x18] sm:$0xff] %v1993
        %1998 = vst.msk [vmem:[#allocation5] sm:$0xff] %vm1768, %v1696
        %1999 = vst.msk [vmem:[#allocation5 + $0x8] sm:$0xff] %vm1768, %v1697
        %2000 = vst.msk [vmem:[#allocation5 + $0x10] sm:$0xff] %vm1768, %v1698
        %2001 = vst.msk [vmem:[#allocation5 + $0x18] sm:$0xff] %vm1768, %v1699
        // Predicated region
        $region93: #{tpu_custom_call.1} parent=59 // pred_check
          %p2002 = pneg %p1157
        $region94: #{tpu_custom_call.1} parent=59 // pred_check_branch
          %2004 = sbr.rel (%p2002) target = $region96
        $region95: #{tpu_custom_call.1} parent=59 // pred_region
          %v2005 = vld [vmem:[#allocation7] sm:$0xff]
          %v2006 = vld [vmem:[#allocation7 + $0x8] sm:$0xff]
          %v2007 = vld [vmem:[#allocation7 + $0x10] sm:$0xff]
          %v2008 = vld [vmem:[#allocation7 + $0x18] sm:$0xff]
          %v2009 = vld [vmem:[#allocation6] sm:$0xff]
          %v2010 = vld [vmem:[#allocation6 + $0x8] sm:$0xff]
          %v2011 = vld [vmem:[#allocation6 + $0x10] sm:$0xff]
          %v2012 = vld [vmem:[#allocation6 + $0x18] sm:$0xff]
          %v2013 = vrcp.pop %v2009
          %v2014 = vrcp.pop %v2010
          %v2015 = vrcp.pop %v2011
          %v2016 = vrcp.pop %v2012
          %2018 = vset.pattern.permute.xlu0 0
          %2019 = vperm.xlu0 %2018, %v2013
          %v2020 = vpop.permute.xlu0 %2019
          %2023 = vset.pattern.permute.xlu0 0
          %2024 = vperm.xlu0 %2023, %v2014
          %v2025 = vpop.permute.xlu0 %2024
          %2028 = vset.pattern.permute.xlu0 0
          %2029 = vperm.xlu0 %2028, %v2015
          %v2030 = vpop.permute.xlu0 %2029
          %2033 = vset.pattern.permute.xlu0 0
          %2034 = vperm.xlu0 %2033, %v2016
          %v2035 = vpop.permute.xlu0 %2034
          %v2037 = vmul.f32 %v2005, %v2020
          %v2038 = vmul.f32 %v2006, %v2025
          %v2039 = vmul.f32 %v2007, %v2030
          %v2040 = vmul.f32 %v2008, %v2035
          %v2041 = vpack.c.bf16 %v2037, %v2037
          %v2042 = vld [vmem:[#allocation17] sm:$0xf]
          %v2043 = vld [vmem:[#allocation17 + $0x4] sm:$0xf]
          %v2044 = vld [vmem:[#allocation17 + $0x8] sm:$0xf]
          %v2045 = vld [vmem:[#allocation17 + $0xc] sm:$0xf]
          %v2046 = vld [vmem:[#allocation17 + $0x10] sm:$0xf]
          %v2047 = vld [vmem:[#allocation17 + $0x14] sm:$0xf]
          %v2048 = vld [vmem:[#allocation17 + $0x18] sm:$0xf]
          %v2049 = vld [vmem:[#allocation17 + $0x1c] sm:$0xf]
          %v2050 = vld [vmem:[#allocation17 + $0x20] sm:$0xf]
          %v2051 = vld [vmem:[#allocation17 + $0x24] sm:$0xf]
          %v2052 = vld [vmem:[#allocation17 + $0x28] sm:$0xf]
          %v2053 = vld [vmem:[#allocation17 + $0x2c] sm:$0xf]
          %v2054 = vld [vmem:[#allocation17 + $0x30] sm:$0xf]
          %v2055 = vld [vmem:[#allocation17 + $0x34] sm:$0xf]
          %v2056 = vld [vmem:[#allocation17 + $0x38] sm:$0xf]
          %v2057 = vld [vmem:[#allocation17 + $0x3c] sm:$0xf]
          %v2058 = vpack.c.bf16 %v2038, %v2038
          %s2059 = scalar_lea.vmem [#allocation17], 64
          %v2060 = vld [vmem:[%s2059] sm:$0xf]
          %v2061 = vld [vmem:[%s2059 + $0x4] sm:$0xf]
          %v2062 = vld [vmem:[%s2059 + $0x8] sm:$0xf]
          %v2063 = vld [vmem:[%s2059 + $0xc] sm:$0xf]
          %v2064 = vld [vmem:[%s2059 + $0x10] sm:$0xf]
          %v2065 = vld [vmem:[%s2059 + $0x14] sm:$0xf]
          %v2066 = vld [vmem:[%s2059 + $0x18] sm:$0xf]
          %v2067 = vld [vmem:[%s2059 + $0x1c] sm:$0xf]
          %v2068 = vld [vmem:[%s2059 + $0x20] sm:$0xf]
          %v2069 = vld [vmem:[%s2059 + $0x24] sm:$0xf]
          %v2070 = vld [vmem:[%s2059 + $0x28] sm:$0xf]
          %v2071 = vld [vmem:[%s2059 + $0x2c] sm:$0xf]
          %v2072 = vld [vmem:[%s2059 + $0x30] sm:$0xf]
          %v2073 = vld [vmem:[%s2059 + $0x34] sm:$0xf]
          %v2074 = vld [vmem:[%s2059 + $0x38] sm:$0xf]
          %v2075 = vld [vmem:[%s2059 + $0x3c] sm:$0xf]
          %v2092 = vunpack.c.l.b16 %v2060
          %v2093 = vunpack.c.l.b16 %v2061
          %v2094 = vunpack.c.l.b16 %v2062
          %v2095 = vunpack.c.l.b16 %v2063
          %v2096 = vunpack.c.l.b16 %v2064
          %v2097 = vunpack.c.l.b16 %v2065
          %v2098 = vunpack.c.l.b16 %v2066
          %v2099 = vunpack.c.l.b16 %v2067
          %v2100 = vunpack.c.l.b16 %v2068
          %v2101 = vunpack.c.l.b16 %v2069
          %v2102 = vunpack.c.l.b16 %v2070
          %v2103 = vunpack.c.l.b16 %v2071
          %v2104 = vunpack.c.l.b16 %v2072
          %v2105 = vunpack.c.l.b16 %v2073
          %v2106 = vunpack.c.l.b16 %v2074
          %v2107 = vunpack.c.l.b16 %v2075
          %v2108 = vpack.c.b16 %v2093, %v2092
          %v2109 = vpack.c.b16 %v2095, %v2094
          %v2110 = vpack.c.b16 %v2097, %v2096
          %v2111 = vpack.c.b16 %v2099, %v2098
          %v2112 = vpack.c.b16 %v2101, %v2100
          %v2113 = vpack.c.b16 %v2103, %v2102
          %v2114 = vpack.c.b16 %v2105, %v2104
          %v2115 = vpack.c.b16 %v2107, %v2106
          %2124 = vmatprep.subr.bf16.mxu0 0
          %2125 = vmatpush1.bf16.msra.mxu0 %v2108
          %2126 = vmatprep.subr.bf16.mxu0 0
          %2127 = vmatpush1.bf16.msra.mxu0 %v2109
          %2128 = vmatprep.subr.bf16.mxu0 0
          %2129 = vmatpush1.bf16.msra.mxu0 %v2110
          %2130 = vmatprep.subr.bf16.mxu0 0
          %2131 = vmatpush1.bf16.msra.mxu0 %v2111
          %2132 = vmatprep.subr.bf16.mxu0 0
          %2133 = vmatpush1.bf16.msra.mxu0 %v2112
          %2134 = vmatprep.subr.bf16.mxu0 0
          %2135 = vmatpush1.bf16.msra.mxu0 %v2113
          %2136 = vmatprep.subr.bf16.mxu0 0
          %2137 = vmatpush1.bf16.msra.mxu0 %v2114
          %2138 = vmatprep.subr.bf16.mxu0 0
          %2139 = vmatpush1.bf16.msra.mxu0 %v2115
          %2140 = vmatprep.subr.bf16.mxu0 0
          %2141 = vmatpush1.bf16.msra.mxu0 0
          %2142 = vmatprep.subr.bf16.mxu0 0
          %2143 = vmatpush1.bf16.msra.mxu0 0
          %2144 = vmatprep.subr.bf16.mxu0 0
          %2145 = vmatpush1.bf16.msra.mxu0 0
          %2146 = vmatprep.subr.bf16.mxu0 0
          %2147 = vmatpush1.bf16.msra.mxu0 0
          %2148 = vmatprep.subr.bf16.mxu0 0
          %2149 = vmatpush1.bf16.msra.mxu0 0
          %2150 = vmatprep.subr.bf16.mxu0 0
          %2151 = vmatpush1.bf16.msra.mxu0 0
          %2152 = vmatprep.subr.bf16.mxu0 0
          %2153 = vmatpush1.bf16.msra.mxu0 0
          %2154 = vmatprep.subr.bf16.mxu0 0
          %2155 = vmatpush1.bf16.msra.mxu0 0
          %2156 = vmatprep.mubr.bf16.mxu0 0
          %2157 = vmatmul.mubr.bf16.gmra.mrb[0].mxu0 %v2058
          %v2158 = vpop.f32.mrb[0].mxu0
          %v2159 = vadd.f32 0.0, %v2158
          %v2160 = vpop.f32.mrb[0].mxu0
          %v2161 = vpop.f32.mrb[0].mxu0
          %v2162 = vpop.f32.mrb[0].mxu0
          %2163 = vdwg.mxu0
          %v2180 = vunpack.c.l.b16 %v2042
          %v2181 = vunpack.c.l.b16 %v2043
          %v2182 = vunpack.c.l.b16 %v2044
          %v2183 = vunpack.c.l.b16 %v2045
          %v2184 = vunpack.c.l.b16 %v2046
          %v2185 = vunpack.c.l.b16 %v2047
          %v2186 = vunpack.c.l.b16 %v2048
          %v2187 = vunpack.c.l.b16 %v2049
          %v2188 = vunpack.c.l.b16 %v2050
          %v2189 = vunpack.c.l.b16 %v2051
          %v2190 = vunpack.c.l.b16 %v2052
          %v2191 = vunpack.c.l.b16 %v2053
          %v2192 = vunpack.c.l.b16 %v2054
          %v2193 = vunpack.c.l.b16 %v2055
          %v2194 = vunpack.c.l.b16 %v2056
          %v2195 = vunpack.c.l.b16 %v2057
          %v2196 = vpack.c.b16 %v2181, %v2180
          %v2197 = vpack.c.b16 %v2183, %v2182
          %v2198 = vpack.c.b16 %v2185, %v2184
          %v2199 = vpack.c.b16 %v2187, %v2186
          %v2200 = vpack.c.b16 %v2189, %v2188
          %v2201 = vpack.c.b16 %v2191, %v2190
          %v2202 = vpack.c.b16 %v2193, %v2192
          %v2203 = vpack.c.b16 %v2195, %v2194
          %2212 = vmatprep.subr.bf16.mxu0 0
          %2213 = vmatpush1.bf16.msra.mxu0 %v2196
          %2214 = vmatprep.subr.bf16.mxu0 0
          %2215 = vmatpush1.bf16.msra.mxu0 %v2197
          %2216 = vmatprep.subr.bf16.mxu0 0
          %2217 = vmatpush1.bf16.msra.mxu0 %v2198
          %2218 = vmatprep.subr.bf16.mxu0 0
          %2219 = vmatpush1.bf16.msra.mxu0 %v2199
          %2220 = vmatprep.subr.bf16.mxu0 0
          %2221 = vmatpush1.bf16.msra.mxu0 %v2200
          %2222 = vmatprep.subr.bf16.mxu0 0
          %2223 = vmatpush1.bf16.msra.mxu0 %v2201
          %2224 = vmatprep.subr.bf16.mxu0 0
          %2225 = vmatpush1.bf16.msra.mxu0 %v2202
          %2226 = vmatprep.subr.bf16.mxu0 0
          %2227 = vmatpush1.bf16.msra.mxu0 %v2203
          %2228 = vmatprep.subr.bf16.mxu0 0
          %2229 = vmatpush1.bf16.msra.mxu0 0
          %2230 = vmatprep.subr.bf16.mxu0 0
          %2231 = vmatpush1.bf16.msra.mxu0 0
          %2232 = vmatprep.subr.bf16.mxu0 0
          %2233 = vmatpush1.bf16.msra.mxu0 0
          %2234 = vmatprep.subr.bf16.mxu0 0
          %2235 = vmatpush1.bf16.msra.mxu0 0
          %2236 = vmatprep.subr.bf16.mxu0 0
          %2237 = vmatpush1.bf16.msra.mxu0 0
          %2238 = vmatprep.subr.bf16.mxu0 0
          %2239 = vmatpush1.bf16.msra.mxu0 0
          %2240 = vmatprep.subr.bf16.mxu0 0
          %2241 = vmatpush1.bf16.msra.mxu0 0
          %2242 = vmatprep.subr.bf16.mxu0 0
          %2243 = vmatpush1.bf16.msra.mxu0 0
          %2244 = vmatprep.mubr.bf16.mxu0 0
          %2245 = vmatmul.mubr.bf16.gmra.mrb[0].mxu0 %v2041
          %v2246 = vpop.f32.mrb[0].mxu0
          %v2247 = vadd.f32 %v2159, %v2246
          %v2248 = vpop.f32.mrb[0].mxu0
          %v2249 = vpop.f32.mrb[0].mxu0
          %v2250 = vpop.f32.mrb[0].mxu0
          %2251 = vdwg.mxu0
          %v2252 = vpack.c.bf16 %v2039, %v2039
          %s2253 = scalar_lea.vmem [#allocation17], 128
          %v2254 = vld [vmem:[%s2253] sm:$0xf]
          %v2255 = vld [vmem:[%s2253 + $0x4] sm:$0xf]
          %v2256 = vld [vmem:[%s2253 + $0x8] sm:$0xf]
          %v2257 = vld [vmem:[%s2253 + $0xc] sm:$0xf]
          %v2258 = vld [vmem:[%s2253 + $0x10] sm:$0xf]
          %v2259 = vld [vmem:[%s2253 + $0x14] sm:$0xf]
          %v2260 = vld [vmem:[%s2253 + $0x18] sm:$0xf]
          %v2261 = vld [vmem:[%s2253 + $0x1c] sm:$0xf]
          %v2262 = vld [vmem:[%s2253 + $0x20] sm:$0xf]
          %v2263 = vld [vmem:[%s2253 + $0x24] sm:$0xf]
          %v2264 = vld [vmem:[%s2253 + $0x28] sm:$0xf]
          %v2265 = vld [vmem:[%s2253 + $0x2c] sm:$0xf]
          %v2266 = vld [vmem:[%s2253 + $0x30] sm:$0xf]
          %v2267 = vld [vmem:[%s2253 + $0x34] sm:$0xf]
          %v2268 = vld [vmem:[%s2253 + $0x38] sm:$0xf]
          %v2269 = vld [vmem:[%s2253 + $0x3c] sm:$0xf]
          %v2286 = vunpack.c.l.b16 %v2254
          %v2287 = vunpack.c.l.b16 %v2255
          %v2288 = vunpack.c.l.b16 %v2256
          %v2289 = vunpack.c.l.b16 %v2257
          %v2290 = vunpack.c.l.b16 %v2258
          %v2291 = vunpack.c.l.b16 %v2259
          %v2292 = vunpack.c.l.b16 %v2260
          %v2293 = vunpack.c.l.b16 %v2261
          %v2294 = vunpack.c.l.b16 %v2262
          %v2295 = vunpack.c.l.b16 %v2263
          %v2296 = vunpack.c.l.b16 %v2264
          %v2297 = vunpack.c.l.b16 %v2265
          %v2298 = vunpack.c.l.b16 %v2266
          %v2299 = vunpack.c.l.b16 %v2267
          %v2300 = vunpack.c.l.b16 %v2268
          %v2301 = vunpack.c.l.b16 %v2269
          %v2302 = vpack.c.b16 %v2287, %v2286
          %v2303 = vpack.c.b16 %v2289, %v2288
          %v2304 = vpack.c.b16 %v2291, %v2290
          %v2305 = vpack.c.b16 %v2293, %v2292
          %v2306 = vpack.c.b16 %v2295, %v2294
          %v2307 = vpack.c.b16 %v2297, %v2296
          %v2308 = vpack.c.b16 %v2299, %v2298
          %v2309 = vpack.c.b16 %v2301, %v2300
          %2318 = vmatprep.subr.bf16.mxu0 0
          %2319 = vmatpush1.bf16.msra.mxu0 %v2302
          %2320 = vmatprep.subr.bf16.mxu0 0
          %2321 = vmatpush1.bf16.msra.mxu0 %v2303
          %2322 = vmatprep.subr.bf16.mxu0 0
          %2323 = vmatpush1.bf16.msra.mxu0 %v2304
          %2324 = vmatprep.subr.bf16.mxu0 0
          %2325 = vmatpush1.bf16.msra.mxu0 %v2305
          %2326 = vmatprep.subr.bf16.mxu0 0
          %2327 = vmatpush1.bf16.msra.mxu0 %v2306
          %2328 = vmatprep.subr.bf16.mxu0 0
          %2329 = vmatpush1.bf16.msra.mxu0 %v2307
          %2330 = vmatprep.subr.bf16.mxu0 0
          %2331 = vmatpush1.bf16.msra.mxu0 %v2308
          %2332 = vmatprep.subr.bf16.mxu0 0
          %2333 = vmatpush1.bf16.msra.mxu0 %v2309
          %2334 = vmatprep.subr.bf16.mxu0 0
          %2335 = vmatpush1.bf16.msra.mxu0 0
          %2336 = vmatprep.subr.bf16.mxu0 0
          %2337 = vmatpush1.bf16.msra.mxu0 0
          %2338 = vmatprep.subr.bf16.mxu0 0
          %2339 = vmatpush1.bf16.msra.mxu0 0
          %2340 = vmatprep.subr.bf16.mxu0 0
          %2341 = vmatpush1.bf16.msra.mxu0 0
          %2342 = vmatprep.subr.bf16.mxu0 0
          %2343 = vmatpush1.bf16.msra.mxu0 0
          %2344 = vmatprep.subr.bf16.mxu0 0
          %2345 = vmatpush1.bf16.msra.mxu0 0
          %2346 = vmatprep.subr.bf16.mxu0 0
          %2347 = vmatpush1.bf16.msra.mxu0 0
          %2348 = vmatprep.subr.bf16.mxu0 0
          %2349 = vmatpush1.bf16.msra.mxu0 0
          %2350 = vmatprep.mubr.bf16.mxu0 0
          %2351 = vmatmul.mubr.bf16.gmra.mrb[0].mxu0 %v2252
          %v2352 = vpop.f32.mrb[0].mxu0
          %v2353 = vadd.f32 0.0, %v2352
          %v2354 = vpop.f32.mrb[0].mxu0
          %v2355 = vpop.f32.mrb[0].mxu0
          %v2356 = vpop.f32.mrb[0].mxu0
          %2357 = vdwg.mxu0
          %v2358 = vadd.f32 %v2247, %v2353
          %v2359 = vpack.c.bf16 %v2040, %v2040
          %s2360 = scalar_lea.vmem [#allocation17], 192
          %v2361 = vld [vmem:[%s2360] sm:$0xf]
          %v2362 = vld [vmem:[%s2360 + $0x4] sm:$0xf]
          %v2363 = vld [vmem:[%s2360 + $0x8] sm:$0xf]
          %v2364 = vld [vmem:[%s2360 + $0xc] sm:$0xf]
          %v2365 = vld [vmem:[%s2360 + $0x10] sm:$0xf]
          %v2366 = vld [vmem:[%s2360 + $0x14] sm:$0xf]
          %v2367 = vld [vmem:[%s2360 + $0x18] sm:$0xf]
          %v2368 = vld [vmem:[%s2360 + $0x1c] sm:$0xf]
          %v2369 = vld [vmem:[%s2360 + $0x20] sm:$0xf]
          %v2370 = vld [vmem:[%s2360 + $0x24] sm:$0xf]
          %v2371 = vld [vmem:[%s2360 + $0x28] sm:$0xf]
          %v2372 = vld [vmem:[%s2360 + $0x2c] sm:$0xf]
          %v2373 = vld [vmem:[%s2360 + $0x30] sm:$0xf]
          %v2374 = vld [vmem:[%s2360 + $0x34] sm:$0xf]
          %v2375 = vld [vmem:[%s2360 + $0x38] sm:$0xf]
          %v2376 = vld [vmem:[%s2360 + $0x3c] sm:$0xf]
          %v2393 = vunpack.c.l.b16 %v2361
          %v2394 = vunpack.c.l.b16 %v2362
          %v2395 = vunpack.c.l.b16 %v2363
          %v2396 = vunpack.c.l.b16 %v2364
          %v2397 = vunpack.c.l.b16 %v2365
          %v2398 = vunpack.c.l.b16 %v2366
          %v2399 = vunpack.c.l.b16 %v2367
          %v2400 = vunpack.c.l.b16 %v2368
          %v2401 = vunpack.c.l.b16 %v2369
          %v2402 = vunpack.c.l.b16 %v2370
          %v2403 = vunpack.c.l.b16 %v2371
          %v2404 = vunpack.c.l.b16 %v2372
          %v2405 = vunpack.c.l.b16 %v2373
          %v2406 = vunpack.c.l.b16 %v2374
          %v2407 = vunpack.c.l.b16 %v2375
          %v2408 = vunpack.c.l.b16 %v2376
          %v2409 = vpack.c.b16 %v2394, %v2393
          %v2410 = vpack.c.b16 %v2396, %v2395
          %v2411 = vpack.c.b16 %v2398, %v2397
          %v2412 = vpack.c.b16 %v2400, %v2399
          %v2413 = vpack.c.b16 %v2402, %v2401
          %v2414 = vpack.c.b16 %v2404, %v2403
          %v2415 = vpack.c.b16 %v2406, %v2405
          %v2416 = vpack.c.b16 %v2408, %v2407
          %2425 = vmatprep.subr.bf16.mxu0 0
          %2426 = vmatpush1.bf16.msra.mxu0 %v2409
          %2427 = vmatprep.subr.bf16.mxu0 0
          %2428 = vmatpush1.bf16.msra.mxu0 %v2410
          %2429 = vmatprep.subr.bf16.mxu0 0
          %2430 = vmatpush1.bf16.msra.mxu0 %v2411
          %2431 = vmatprep.subr.bf16.mxu0 0
          %2432 = vmatpush1.bf16.msra.mxu0 %v2412
          %2433 = vmatprep.subr.bf16.mxu0 0
          %2434 = vmatpush1.bf16.msra.mxu0 %v2413
          %2435 = vmatprep.subr.bf16.mxu0 0
          %2436 = vmatpush1.bf16.msra.mxu0 %v2414
          %2437 = vmatprep.subr.bf16.mxu0 0
          %2438 = vmatpush1.bf16.msra.mxu0 %v2415
          %2439 = vmatprep.subr.bf16.mxu0 0
          %2440 = vmatpush1.bf16.msra.mxu0 %v2416
          %2441 = vmatprep.subr.bf16.mxu0 0
          %2442 = vmatpush1.bf16.msra.mxu0 0
          %2443 = vmatprep.subr.bf16.mxu0 0
          %2444 = vmatpush1.bf16.msra.mxu0 0
          %2445 = vmatprep.subr.bf16.mxu0 0
          %2446 = vmatpush1.bf16.msra.mxu0 0
          %2447 = vmatprep.subr.bf16.mxu0 0
          %2448 = vmatpush1.bf16.msra.mxu0 0
          %2449 = vmatprep.subr.bf16.mxu0 0
          %2450 = vmatpush1.bf16.msra.mxu0 0
          %2451 = vmatprep.subr.bf16.mxu0 0
          %2452 = vmatpush1.bf16.msra.mxu0 0
          %2453 = vmatprep.subr.bf16.mxu0 0
          %2454 = vmatpush1.bf16.msra.mxu0 0
          %2455 = vmatprep.subr.bf16.mxu0 0
          %2456 = vmatpush1.bf16.msra.mxu0 0
          %2457 = vmatprep.mubr.bf16.mxu0 0
          %2458 = vmatmul.mubr.bf16.gmra.mrb[0].mxu0 %v2359
          %v2459 = vpop.f32.mrb[0].mxu0
          %v2460 = vadd.f32 0.0, %v2459
          %v2461 = vpop.f32.mrb[0].mxu0
          %v2462 = vpop.f32.mrb[0].mxu0
          %v2463 = vpop.f32.mrb[0].mxu0
          %2464 = vdwg.mxu0
          %v2465 = vadd.f32 %v2358, %v2460
          %v2466 = vld [vmem:[%s9] sm:$0x1]
          %v2468 = vlaneseq
          %v2469 = vshrl.u32 %v2468, 7
          %v2470 = vsub.s32 0, %v2469
          %v2471 = vrot.slane %v2466, %v2470
          %v2473 = vadd.f32 %v2465, %v2471
          %2474 = vst [vmem:[%s496] sm:$0xff] %v2473
        $region96: #{tpu_custom_call.1} parent=59 // pred_fallthru
          _
        %s2475 = sand.u32 %s285, 1
        %s2476 = scalar_lea.sflag [#allocation10], %s2475
        %s2477 = sand.u32 %s285, 1
        %s2478 = smul.addr %s2477, 8
        %s2479 = scalar_lea.vmem [#allocation19], %s2478
        // Predicated region
        $region97: #{tpu_custom_call.1} parent=59 // pred_check
          %p2480 = pneg %p295
        $region98: #{tpu_custom_call.1} parent=59 // pred_check_branch
          %2482 = sbr.rel (%p2480) target = $region100
        $region99: #{tpu_custom_call.1} parent=59 // pred_region
          %s2484 = ssub.s32 128, 128
          %2485 = vsyncadd %s2476, %s2484
          %s2486 = sadd.s32 %s38, %s37
          %s2487 = smul.addr %s2486, 128
          %s2488 = scalar_lea.hbm %s10, %s2487
          %s2490 = sshll.u32 %s2479, 4
          %s2491 = int_to_ptr.vmem [resolvable:$true] %s2490
          %2493 = dma.vmem_to_hbm [thread:$0]  %s2491, 128, %s2488, %s2476
        $region100: #{tpu_custom_call.1} parent=59 // pred_fallthru
          _
      $region60: #{tpu_custom_call.1} parent=5 // pred_fallthru
        _
      %p2494 = scmp.le.s32.totalorder 2, %s27
      // Predicated region
      $region101: #{tpu_custom_call.1} parent=5 // pred_check
        %p2495 = pneg %p2494
      $region102: #{tpu_custom_call.1} parent=5 // pred_check_branch
        %2497 = sbr.rel (%p2495) target = $region104
      $region103: #{tpu_custom_call.1} parent=5 // pred_region
        %s2498 = ssub.s32 %s27, 2
        // Predicated region
        $region105: #{tpu_custom_call.1} parent=103 // pred_check
          %p2499 = pneg %p301
        $region106: #{tpu_custom_call.1} parent=103 // pred_check_branch
          %2501 = sbr.rel (%p2499) target = $region108
        $region107: #{tpu_custom_call.1} parent=103 // pred_region
          %s2502 = sand.u32 %s286, 1
          %s2503 = scalar_lea.sflag [#allocation10], %s2502
          %s2504 = sand.u32 %s286, 1
          %s2505 = smul.addr %s2504, 8
          %s2506 = scalar_lea.vmem [#allocation19], %s2505
          %2507 = dma.done %s2503, 128
        $region108: #{tpu_custom_call.1} parent=103 // pred_fallthru
          _
      $region104: #{tpu_custom_call.1} parent=5 // pred_fallthru
        _
    $region6: #{tpu_custom_call.1} parent=1 // loop_footer
      %s31 = sadd.s32 1, %s27
    $region7: #{tpu_custom_call.1} parent=1 // loop_footer_branch
      %26 = sbr.rel target = $region3
    $region8: #{tpu_custom_call.1} parent=1 // loop_exit
      _
    %2508 = vsyncpa [#allocation9], 1
    %s2509 = scalar_lea.sflag [#allocation9], 1
    %2510 = vsyncpa %s2509, 1
    %2511 = vsyncpa [#allocation12], 1
    %s2512 = scalar_lea.sflag [#allocation12], 1
    %2513 = vsyncpa %s2512, 1
    %2514 = vsyncpa [#allocation15], 1
    %2515 = vsyncpa [#allocation18], 1
    %2516 = vsyncpa [#allocation10], 1
    %s2517 = scalar_lea.sflag [#allocation10], 1
    %2518 = vsyncpa %s2517, 1

</llo_original>
